<compile_context>
chip_gen: v7x
topology: tpu7x:2x2x1
jax: 0.10.0
libtpu: 0.0.40
codegen_flags: <defaults>
</compile_context>

<pallas_src>
import functools

import jax
import jax.numpy as jnp
from jax import lax
from jax.experimental import pallas as pl
from jax.experimental.pallas import tpu as pltpu

HIDDEN = 16


def _pick_tile_b(B, z_dim, *, vmem_budget_bytes=10 << 20, min_steps=4):
    """Largest lane-dense batch tile that (a) fits a conservative VMEM budget
    for the double-buffered in/out activation blocks and (b) keeps >= min_steps
    grid steps when possible (megacore sharding + DMA/compute overlap)."""
    if B < 128 or B % 128 != 0:
        return B  # tiny / odd batch: single full-extent block
    # Per batch column: (in block z_dim f32 + out block z_dim f32) x 2 buffers.
    per_col_bytes = 2 * 2 * z_dim * 4
    budget_cols = max(128, vmem_budget_bytes // per_col_bytes)
    cands = [t for t in range(128, B + 1, 128) if B % t == 0]
    for steps_req in (min_steps, 2, 1):
        ok = [t for t in cands if t <= budget_cols and B // t >= steps_req]
        if ok:
            return max(ok)
    return B


def _pick_chunk(tile_b):
    """Lane-chunk (columns) processed per inner-loop iteration: bounds the live
    compute working set while the DMA tile stays large."""
    if tile_b <= 512:
        return tile_b
    for c in (512, 384, 256, 128):
        if tile_b % c == 0:
            return c
    return tile_b  # non-128-multiple fallback: single chunk


def mlp_forward(z, params, *, tile_b=None):
    """z: (B, z_dim) f32.  params: nn.Linear-native (out, in) weights + (out,) biases."""
    B, z_dim = z.shape

    if tile_b is None:
        tile_b = _pick_tile_b(B, z_dim)
    assert B % tile_b == 0
    assert tile_b == B or tile_b % 128 == 0, (
        "batch tile must be lane-dense (multiple of 128) or the full batch")

    chunk = _pick_chunk(tile_b)
    n_chunks = tile_b // chunk

    w2, w3, w4, w5 = params["w2"], params["w3"], params["w4"], params["w5"]
    # Column-vector biases broadcast along the lane (batch) axis in-kernel.
    b2 = params["b2"].reshape(HIDDEN, 1)
    b3 = params["b3"].reshape(HIDDEN, 1)
    b4 = params["b4"].reshape(HIDDEN, 1)
    b5 = params["b5"].reshape(z_dim, 1)

    def kernel(x_ref, w2_ref, w3_ref, w4_ref, w5_ref,
               b2_ref, b3_ref, b4_ref, b5_ref, o_ref):
        # x_ref: (tile_b, z_dim) natural-layout activations.
        # o_ref: (z_dim, tile_b) transposed (lane-dense) output.
        w2_v = w2_ref[...]; w3_v = w3_ref[...]; w4_v = w4_ref[...]; w5_v = w5_ref[...]
        b2_v = b2_ref[...]; b3_v = b3_ref[...]; b4_v = b4_ref[...]; b5_v = b5_ref[...]

        def do_chunk(c):
            col = pl.multiple_of(c * chunk, chunk)
            x = x_ref[pl.ds(col, chunk), :]                       # (chunk, z_dim)
            # h1^T = W2 @ x^T  (contract W2's in-axis with x's last axis).
            h = jnp.tanh(
                lax.dot_general(w2_v, x, (((1,), (1,)), ((), ())),
                                preferred_element_type=jnp.float32) + b2_v)
            h = jnp.tanh(jnp.dot(w3_v, h, preferred_element_type=jnp.float32) + b3_v)
            h = jnp.tanh(jnp.dot(w4_v, h, preferred_element_type=jnp.float32) + b4_v)
            y = jnp.dot(w5_v, h, preferred_element_type=jnp.float32) + b5_v
            o_ref[:, pl.ds(col, chunk)] = y.astype(o_ref.dtype)   # lane-dense store

        if n_chunks == 1:
            do_chunk(0)
        else:
            def body(c, carry):
                do_chunk(c)
                return carry
            lax.fori_loop(0, n_chunks, body, 0, unroll=n_chunks <= 8)

    const_map = lambda i: (0, 0)  # grid-invariant: weights/biases DMA'd once
    out_t = pl.pallas_call(
        kernel,
        out_shape=jax.ShapeDtypeStruct((z_dim, B), z.dtype),
        grid=(B // tile_b,),
        in_specs=[
            pl.BlockSpec((tile_b, z_dim), lambda i: (i, 0)),   # activations (natural)
            pl.BlockSpec(w2.shape, const_map),
            pl.BlockSpec(w3.shape, const_map),
            pl.BlockSpec(w4.shape, const_map),
            pl.BlockSpec(w5.shape, const_map),
            pl.BlockSpec(b2.shape, const_map),
            pl.BlockSpec(b3.shape, const_map),
            pl.BlockSpec(b4.shape, const_map),
            pl.BlockSpec(b5.shape, const_map),
        ],
        out_specs=pl.BlockSpec((z_dim, tile_b), lambda i: (0, i)),
        compiler_params=pltpu.CompilerParams(
            dimension_semantics=("parallel",)),
    )(z, w2, w3, w4, w5, b2, b3, b4, b5)

    # Single consumer-side un-transpose back to the PyTorch (B, z_dim) layout
    # (fused under jit; a real pipeline would consume the (features, batch) slab).
    return out_t.T


def init_params(key, z_dim, hidden=HIDDEN):
    """PyTorch-style uniform(-1/sqrt(fan_in), 1/sqrt(fan_in)) init.
    Weights stored in nn.Linear-native (out, in) layout, biases as (out,)."""
    dims = [(hidden, z_dim), (hidden, hidden), (hidden, hidden), (z_dim, hidden)]
    names = ["2", "3", "4", "5"]
    params = {}
    for (fan_out, fan_in), n in zip(dims, names):
        key, kw, kb = jax.random.split(key, 3)
        bound = 1.0 / float(jnp.sqrt(jnp.float32(fan_in)))
        params["w" + n] = jax.random.uniform(
            kw, (fan_out, fan_in), jnp.float32, -bound, bound)
        params["b" + n] = jax.random.uniform(
            kb, (fan_out,), jnp.float32, -bound, bound)
    return params


def mlp_reference(z, p):
    h = jnp.tanh(z @ p["w2"].T + p["b2"])
    h = jnp.tanh(h @ p["w3"].T + p["b3"])
    h = jnp.tanh(h @ p["w4"].T + p["b4"])
    return h @ p["w5"].T + p["b5"]


if __name__ == "__main__":
    # Lane-dense demo sized to exercise both the multi-step grid (4 steps of
    # tile_b=1024) and the in-kernel chunk loop (2 chunks of 512 columns).
    B, Z_DIM = 4096, 32
    key = jax.random.PRNGKey(0)
    key, kz = jax.random.split(key)
    z = jax.random.normal(kz, (B, Z_DIM), jnp.float32)
    params = init_params(key, Z_DIM)

    forward = jax.jit(mlp_forward)
    out = jax.block_until_ready(forward(z, params))

    ref = mlp_reference(z, params)
    assert out.shape == (B, Z_DIM)
    assert jnp.allclose(out, ref, atol=1e-5, rtol=1e-5)
    print("KERNEL_OK")
</pallas_src>

<mosaic_0001>
module attributes {stable_mosaic.version = 11 : i64} {
  func.func @kernel(%arg0: i32, %arg1: memref<1024x32xf32, #tpu.memory_space<vmem>>, %arg2: memref<16x32xf32, #tpu.memory_space<vmem>>, %arg3: memref<16x16xf32, #tpu.memory_space<vmem>>, %arg4: memref<16x16xf32, #tpu.memory_space<vmem>>, %arg5: memref<32x16xf32, #tpu.memory_space<vmem>>, %arg6: memref<16x1xf32, #tpu.memory_space<vmem>>, %arg7: memref<16x1xf32, #tpu.memory_space<vmem>>, %arg8: memref<16x1xf32, #tpu.memory_space<vmem>>, %arg9: memref<32x1xf32, #tpu.memory_space<vmem>>, %arg10: memref<32x1024xf32, #tpu.memory_space<vmem>>) attributes {dimension_semantics = [#tpu.dimension_semantics<parallel>], iteration_bounds = array<i64: 4>, scalar_prefetch = 0 : i64, scratch_operands = 0 : i64, tpu.core_type = #tpu.core_type<tc>, window_params = [{transform_indices = @transform_0, window_bounds = array<i64: 1024, 32>}, {pipeline_mode = #tpu.pipeline_mode<synchronous>, transform_indices = @transform_1, window_bounds = array<i64: 16, 32>}, {pipeline_mode = #tpu.pipeline_mode<synchronous>, transform_indices = @transform_2, window_bounds = array<i64: 16, 16>}, {pipeline_mode = #tpu.pipeline_mode<synchronous>, transform_indices = @transform_3, window_bounds = array<i64: 16, 16>}, {pipeline_mode = #tpu.pipeline_mode<synchronous>, transform_indices = @transform_4, window_bounds = array<i64: 32, 16>}, {pipeline_mode = #tpu.pipeline_mode<synchronous>, transform_indices = @transform_5, window_bounds = array<i64: 16, 1>}, {pipeline_mode = #tpu.pipeline_mode<synchronous>, transform_indices = @transform_6, window_bounds = array<i64: 16, 1>}, {pipeline_mode = #tpu.pipeline_mode<synchronous>, transform_indices = @transform_7, window_bounds = array<i64: 16, 1>}, {pipeline_mode = #tpu.pipeline_mode<synchronous>, transform_indices = @transform_8, window_bounds = array<i64: 32, 1>}, {transform_indices = @transform_9, window_bounds = array<i64: 32, 1024>}]} {
    %c0 = arith.constant 0 : index
    %c0_0 = arith.constant 0 : index
    %0 = vector.load %arg2[%c0, %c0_0] : memref<16x32xf32, #tpu.memory_space<vmem>>, vector<16x32xf32>
    %c0_1 = arith.constant 0 : index
    %c0_2 = arith.constant 0 : index
    %1 = vector.load %arg3[%c0_1, %c0_2] : memref<16x16xf32, #tpu.memory_space<vmem>>, vector<16x16xf32>
    %c0_3 = arith.constant 0 : index
    %c0_4 = arith.constant 0 : index
    %2 = vector.load %arg4[%c0_3, %c0_4] : memref<16x16xf32, #tpu.memory_space<vmem>>, vector<16x16xf32>
    %c0_5 = arith.constant 0 : index
    %c0_6 = arith.constant 0 : index
    %3 = vector.load %arg5[%c0_5, %c0_6] : memref<32x16xf32, #tpu.memory_space<vmem>>, vector<32x16xf32>
    %c0_7 = arith.constant 0 : index
    %c0_8 = arith.constant 0 : index
    %4 = vector.load %arg6[%c0_7, %c0_8] : memref<16x1xf32, #tpu.memory_space<vmem>>, vector<16x1xf32>
    %c0_9 = arith.constant 0 : index
    %c0_10 = arith.constant 0 : index
    %5 = vector.load %arg7[%c0_9, %c0_10] : memref<16x1xf32, #tpu.memory_space<vmem>>, vector<16x1xf32>
    %c0_11 = arith.constant 0 : index
    %c0_12 = arith.constant 0 : index
    %6 = vector.load %arg8[%c0_11, %c0_12] : memref<16x1xf32, #tpu.memory_space<vmem>>, vector<16x1xf32>
    %c0_13 = arith.constant 0 : index
    %c0_14 = arith.constant 0 : index
    %7 = vector.load %arg9[%c0_13, %c0_14] : memref<32x1xf32, #tpu.memory_space<vmem>>, vector<32x1xf32>
    %c0_i32 = arith.constant 0 : i32
    %c512_i32 = arith.constant 512 : i32
    %8 = arith.muli %c0_i32, %c512_i32 : i32
    %9 = tpu.assume_multiple %8, 512 : i32
    %10 = arith.index_cast %9 : i32 to index
    %c0_15 = arith.constant 0 : index
    %11 = vector.load %arg1[%10, %c0_15] : memref<1024x32xf32, #tpu.memory_space<vmem>>, vector<512x32xf32>
    %cst = arith.constant dense<0.000000e+00> : vector<16x512xf32>
    %12 = tpu.matmul %0, %11, %cst {dimension_numbers = #tpu.dot_dimension_numbers<[1], [1], [0], [0], [0, 0, 1, 0], [], []>} : vector<16x32xf32>, vector<512x32xf32>, vector<16x512xf32> -> vector<16x512xf32>
    %13 = vector.broadcast %4 : vector<16x1xf32> to vector<16x512xf32>
    %14 = arith.addf %12, %13 : vector<16x512xf32>
    %15 = math.tanh %14 : vector<16x512xf32>
    %cst_16 = arith.constant dense<0.000000e+00> : vector<16x512xf32>
    %16 = tpu.matmul %1, %15, %cst_16 {dimension_numbers = #tpu.dot_dimension_numbers<[1], [0], [0], [1], [0, 0, 1, 1], [], []>} : vector<16x16xf32>, vector<16x512xf32>, vector<16x512xf32> -> vector<16x512xf32>
    %17 = vector.broadcast %5 : vector<16x1xf32> to vector<16x512xf32>
    %18 = arith.addf %16, %17 : vector<16x512xf32>
    %19 = math.tanh %18 : vector<16x512xf32>
    %cst_17 = arith.constant dense<0.000000e+00> : vector<16x512xf32>
    %20 = tpu.matmul %2, %19, %cst_17 {dimension_numbers = #tpu.dot_dimension_numbers<[1], [0], [0], [1], [0, 0, 1, 1], [], []>} : vector<16x16xf32>, vector<16x512xf32>, vector<16x512xf32> -> vector<16x512xf32>
    %21 = vector.broadcast %6 : vector<16x1xf32> to vector<16x512xf32>
    %22 = arith.addf %20, %21 : vector<16x512xf32>
    %23 = math.tanh %22 : vector<16x512xf32>
    %cst_18 = arith.constant dense<0.000000e+00> : vector<32x512xf32>
    %24 = tpu.matmul %3, %23, %cst_18 {dimension_numbers = #tpu.dot_dimension_numbers<[1], [0], [0], [1], [0, 0, 1, 1], [], []>} : vector<32x16xf32>, vector<16x512xf32>, vector<32x512xf32> -> vector<32x512xf32>
    %25 = vector.broadcast %7 : vector<32x1xf32> to vector<32x512xf32>
    %26 = arith.addf %24, %25 : vector<32x512xf32>
    %c0_19 = arith.constant 0 : index
    %27 = arith.index_cast %9 : i32 to index
    %28 = vector.load %arg10[%c0_19, %27] : memref<32x1024xf32, #tpu.memory_space<vmem>>, vector<32x512xf32>
    tpu.vector_store %arg10[%c0_19, %27], %26 {strides = array<i32>} : memref<32x1024xf32, #tpu.memory_space<vmem>>, vector<32x512xf32>,
    %c1_i32 = arith.constant 1 : i32
    %c512_i32_20 = arith.constant 512 : i32
    %29 = arith.muli %c1_i32, %c512_i32_20 : i32
    %30 = tpu.assume_multiple %29, 512 : i32
    %31 = arith.index_cast %30 : i32 to index
    %c0_21 = arith.constant 0 : index
    %32 = vector.load %arg1[%31, %c0_21] : memref<1024x32xf32, #tpu.memory_space<vmem>>, vector<512x32xf32>
    %cst_22 = arith.constant dense<0.000000e+00> : vector<16x512xf32>
    %33 = tpu.matmul %0, %32, %cst_22 {dimension_numbers = #tpu.dot_dimension_numbers<[1], [1], [0], [0], [0, 0, 1, 0], [], []>} : vector<16x32xf32>, vector<512x32xf32>, vector<16x512xf32> -> vector<16x512xf32>
    %34 = vector.broadcast %4 : vector<16x1xf32> to vector<16x512xf32>
    %35 = arith.addf %33, %34 : vector<16x512xf32>
    %36 = math.tanh %35 : vector<16x512xf32>
    %cst_23 = arith.constant dense<0.000000e+00> : vector<16x512xf32>
    %37 = tpu.matmul %1, %36, %cst_23 {dimension_numbers = #tpu.dot_dimension_numbers<[1], [0], [0], [1], [0, 0, 1, 1], [], []>} : vector<16x16xf32>, vector<16x512xf32>, vector<16x512xf32> -> vector<16x512xf32>
    %38 = vector.broadcast %5 : vector<16x1xf32> to vector<16x512xf32>
    %39 = arith.addf %37, %38 : vector<16x512xf32>
    %40 = math.tanh %39 : vector<16x512xf32>
    %cst_24 = arith.constant dense<0.000000e+00> : vector<16x512xf32>
    %41 = tpu.matmul %2, %40, %cst_24 {dimension_numbers = #tpu.dot_dimension_numbers<[1], [0], [0], [1], [0, 0, 1, 1], [], []>} : vector<16x16xf32>, vector<16x512xf32>, vector<16x512xf32> -> vector<16x512xf32>
    %42 = vector.broadcast %6 : vector<16x1xf32> to vector<16x512xf32>
    %43 = arith.addf %41, %42 : vector<16x512xf32>
    %44 = math.tanh %43 : vector<16x512xf32>
    %cst_25 = arith.constant dense<0.000000e+00> : vector<32x512xf32>
    %45 = tpu.matmul %3, %44, %cst_25 {dimension_numbers = #tpu.dot_dimension_numbers<[1], [0], [0], [1], [0, 0, 1, 1], [], []>} : vector<32x16xf32>, vector<16x512xf32>, vector<32x512xf32> -> vector<32x512xf32>
    %46 = vector.broadcast %7 : vector<32x1xf32> to vector<32x512xf32>
    %47 = arith.addf %45, %46 : vector<32x512xf32>
    %c0_26 = arith.constant 0 : index
    %48 = arith.index_cast %30 : i32 to index
    %49 = vector.load %arg10[%c0_26, %48] : memref<32x1024xf32, #tpu.memory_space<vmem>>, vector<32x512xf32>
    tpu.vector_store %arg10[%c0_26, %48], %47 {strides = array<i32>} : memref<32x1024xf32, #tpu.memory_space<vmem>>, vector<32x512xf32>,
    %c2_i32 = arith.constant 2 : i32
    return
  }
  func.func @transform_0(%arg0: i32) -> (i32, i32) {
    %c0_i32 = arith.constant 0 : i32
    %c0_i32_0 = arith.constant 0 : i32
    return %arg0, %c0_i32 : i32, i32
  }
  func.func @transform_1(%arg0: i32) -> (i32, i32) {
    %c0_i32 = arith.constant 0 : i32
    %c0_i32_0 = arith.constant 0 : i32
    %c0_i32_1 = arith.constant 0 : i32
    return %c0_i32, %c0_i32_0 : i32, i32
  }
  func.func @transform_2(%arg0: i32) -> (i32, i32) {
    %c0_i32 = arith.constant 0 : i32
    %c0_i32_0 = arith.constant 0 : i32
    %c0_i32_1 = arith.constant 0 : i32
    return %c0_i32, %c0_i32_0 : i32, i32
  }
  func.func @transform_3(%arg0: i32) -> (i32, i32) {
    %c0_i32 = arith.constant 0 : i32
    %c0_i32_0 = arith.constant 0 : i32
    %c0_i32_1 = arith.constant 0 : i32
    return %c0_i32, %c0_i32_0 : i32, i32
  }
  func.func @transform_4(%arg0: i32) -> (i32, i32) {
    %c0_i32 = arith.constant 0 : i32
    %c0_i32_0 = arith.constant 0 : i32
    %c0_i32_1 = arith.constant 0 : i32
    return %c0_i32, %c0_i32_0 : i32, i32
  }
  func.func @transform_5(%arg0: i32) -> (i32, i32) {
    %c0_i32 = arith.constant 0 : i32
    %c0_i32_0 = arith.constant 0 : i32
    %c0_i32_1 = arith.constant 0 : i32
    return %c0_i32, %c0_i32_0 : i32, i32
  }
  func.func @transform_6(%arg0: i32) -> (i32, i32) {
    %c0_i32 = arith.constant 0 : i32
    %c0_i32_0 = arith.constant 0 : i32
    %c0_i32_1 = arith.constant 0 : i32
    return %c0_i32, %c0_i32_0 : i32, i32
  }
  func.func @transform_7(%arg0: i32) -> (i32, i32) {
    %c0_i32 = arith.constant 0 : i32
    %c0_i32_0 = arith.constant 0 : i32
    %c0_i32_1 = arith.constant 0 : i32
    return %c0_i32, %c0_i32_0 : i32, i32
  }
  func.func @transform_8(%arg0: i32) -> (i32, i32) {
    %c0_i32 = arith.constant 0 : i32
    %c0_i32_0 = arith.constant 0 : i32
    %c0_i32_1 = arith.constant 0 : i32
    return %c0_i32, %c0_i32_0 : i32, i32
  }
  func.func @transform_9(%arg0: i32) -> (i32, i32) {
    %c0_i32 = arith.constant 0 : i32
    %c0_i32_0 = arith.constant 0 : i32
    return %c0_i32, %arg0 : i32, i32
  }
}

</mosaic_0001>

<llo_original>
// kernel: mlp_forward.1
$region0: #{mlp_forward.1}
  #allocation0 [shape = 'u32[]', space=smem, size = 0x4, offset = 0x4, fixed_abs, tag = 'smem constant byte address 0x4 - core index']
  #allocation1 [shape = 'u32[144,128]{1,0:T(1,128)}', space=vmem, size = 0x12000, scoped, tag = 'internal scratch']
  %s0 = inlined_call_operand.vmem [shape: f32[4096,32], index: 0, kind: input, shape index: {}]
  %s1 = inlined_call_operand.vmem [shape: f32[16,32], index: 1, kind: input, shape index: {}]
  %s2 = inlined_call_operand.vmem [shape: f32[16,16], index: 2, kind: input, shape index: {}]
  %s3 = inlined_call_operand.vmem [shape: f32[16,16], index: 3, kind: input, shape index: {}]
  %s4 = inlined_call_operand.vmem [shape: f32[32,16], index: 4, kind: input, shape index: {}]
  %s5 = inlined_call_operand.vmem [shape: f32[16,1], index: 5, kind: input, shape index: {}]
  %s6 = inlined_call_operand.vmem [shape: f32[16,1], index: 6, kind: input, shape index: {}]
  %s7 = inlined_call_operand.vmem [shape: f32[16,1], index: 7, kind: input, shape index: {}]
  %s8 = inlined_call_operand.vmem [shape: f32[32,1], index: 8, kind: input, shape index: {}]
  %s9 = inlined_call_operand.hbm [shape: f32[32,4096], index: 9, kind: output, shape index: {}]
  %s10 = sld [smem:[#allocation0]]
  $region69: #{mlp_forward.1} parent=0
    _
  %s12 = ssub.s32 1, %s10
  %s13 = scalar_select 0, %s12, %s10
  $region1: #{mlp_forward.1} parent=0
    #allocation2 [shape = 'u8[262144]{0}', space=vmem, size = 0x40000, scoped, tag = 'output window, operand 0']
    #allocation3 [shape = 's32[2]{0}', space=sflag, size = 0x8, scoped, tag = 'scoped memory for mlp_forward.1']
    %14 = vsyncpa [#allocation3], 0
    %s15 = scalar_lea.sflag [#allocation3], 1
    %16 = vsyncpa %s15, 0
    loop: start=0, step=1, limit=6
    $region2: #{mlp_forward.1} parent=1 // loop_pre_header
      _
    $region3: #{mlp_forward.1} parent=1 // loop_header
      %s18 = sphi 0, %s22
      %p19 = scmp.ge.s32.totalorder %s18, 6
      %s28 = sphi 0, %s30
      %s31 = sphi 0, %s28
      %s32 = sphi 0, %s31
      %s48 = sphi 0, %s32
      %s52 = sphi 0, %s52
      %s54 = sphi 0, %s52
      %s55 = sphi 0, %s54
      %s69 = sphi 0, %s55
      %s73 = sphi 0, %s73
      %s75 = sphi 0, %s73
      %s76 = sphi 0, %s75
      %s90 = sphi 0, %s76
      %s94 = sphi 0, %s94
      %s96 = sphi 0, %s94
      %s97 = sphi 0, %s96
      %s111 = sphi 0, %s97
      %s115 = sphi 0, %s115
      %s117 = sphi 0, %s115
      %s118 = sphi 0, %s117
      %s132 = sphi 0, %s118
      %s136 = sphi 0, %s136
      %s138 = sphi 0, %s136
      %s139 = sphi 0, %s138
      %s153 = sphi 0, %s139
      %s157 = sphi 0, %s157
      %s159 = sphi 0, %s157
      %s160 = sphi 0, %s159
      %s174 = sphi 0, %s160
      %s178 = sphi 0, %s178
      %s180 = sphi 0, %s178
      %s181 = sphi 0, %s180
      %s195 = sphi 0, %s181
      %s199 = sphi 0, %s199
      %s201 = sphi 0, %s199
      %s202 = sphi 0, %s201
      %s216 = sphi 0, %s202
      %s222 = sphi 0, %s224
      %s225 = sphi 0, %s222
      %s226 = sphi 0, %s225
      %s242 = sphi 0, %s226
    $region4: #{mlp_forward.1} parent=1 // loop_header_branch
      %21 = sbr.rel (%p19) target = $region8
    $region5: #{mlp_forward.1} parent=1 // loop_body
      %s23 = ssub.s32 %s18, 1
      %s24 = ssub.s32 %s18, 2
      %s25 = sadd.s32 %s18, 1
      %s26 = ssub.s32 %s18, %s25
      %p27 = scmp.eq.s32.totalorder %s26, 0
      %s29 = sadd.s32 %s28, 1
      %s30 = scalar_select %p27, %s28, %s29
      %p33 = pneg %p27
      %p34 = scmp.eq.s32.totalorder %s18, 3
      %p35 = por %p33, %p34
      %p36 = scmp.ne.s32.totalorder %s28, %s31
      %p37 = scmp.eq.s32.totalorder %s18, 0
      %p38 = por %p36, %p37
      %p39 = scmp.ne.s32.totalorder %s28, %s31
      %p40 = scmp.eq.s32.totalorder %s23, 3
      %p41 = por %p39, %p40
      %p42 = scmp.ne.s32.totalorder %s31, %s32
      %p43 = scmp.eq.s32.totalorder %s23, 0
      %p44 = por %p42, %p43
      %p45 = scmp.ne.s32.totalorder %s31, %s32
      %p46 = scmp.eq.s32.totalorder %s24, 3
      %p47 = por %p45, %p46
      %p49 = scmp.ne.s32.totalorder %s32, %s48
      %p50 = scmp.eq.s32.totalorder %s24, 0
      %p51 = por %p49, %p50
      %s53 = sadd.s32 %s52, 1
      %p56 = scmp.eq.s32.totalorder %s18, 3
      %p57 = scmp.ne.s32.totalorder %s52, %s54
      %p58 = scmp.eq.s32.totalorder %s18, 0
      %p59 = por %p57, %p58
      %p60 = scmp.ne.s32.totalorder %s52, %s54
      %p61 = scmp.eq.s32.totalorder %s23, 3
      %p62 = por %p60, %p61
      %p63 = scmp.ne.s32.totalorder %s54, %s55
      %p64 = scmp.eq.s32.totalorder %s23, 0
      %p65 = por %p63, %p64
      %p66 = scmp.ne.s32.totalorder %s54, %s55
      %p67 = scmp.eq.s32.totalorder %s24, 3
      %p68 = por %p66, %p67
      %p70 = scmp.ne.s32.totalorder %s55, %s69
      %p71 = scmp.eq.s32.totalorder %s24, 0
      %p72 = por %p70, %p71
      %s74 = sadd.s32 %s73, 1
      %p77 = scmp.eq.s32.totalorder %s18, 3
      %p78 = scmp.ne.s32.totalorder %s73, %s75
      %p79 = scmp.eq.s32.totalorder %s18, 0
      %p80 = por %p78, %p79
      %p81 = scmp.ne.s32.totalorder %s73, %s75
      %p82 = scmp.eq.s32.totalorder %s23, 3
      %p83 = por %p81, %p82
      %p84 = scmp.ne.s32.totalorder %s75, %s76
      %p85 = scmp.eq.s32.totalorder %s23, 0
      %p86 = por %p84, %p85
      %p87 = scmp.ne.s32.totalorder %s75, %s76
      %p88 = scmp.eq.s32.totalorder %s24, 3
      %p89 = por %p87, %p88
      %p91 = scmp.ne.s32.totalorder %s76, %s90
      %p92 = scmp.eq.s32.totalorder %s24, 0
      %p93 = por %p91, %p92
      %s95 = sadd.s32 %s94, 1
      %p98 = scmp.eq.s32.totalorder %s18, 3
      %p99 = scmp.ne.s32.totalorder %s94, %s96
      %p100 = scmp.eq.s32.totalorder %s18, 0
      %p101 = por %p99, %p100
      %p102 = scmp.ne.s32.totalorder %s94, %s96
      %p103 = scmp.eq.s32.totalorder %s23, 3
      %p104 = por %p102, %p103
      %p105 = scmp.ne.s32.totalorder %s96, %s97
      %p106 = scmp.eq.s32.totalorder %s23, 0
      %p107 = por %p105, %p106
      %p108 = scmp.ne.s32.totalorder %s96, %s97
      %p109 = scmp.eq.s32.totalorder %s24, 3
      %p110 = por %p108, %p109
      %p112 = scmp.ne.s32.totalorder %s97, %s111
      %p113 = scmp.eq.s32.totalorder %s24, 0
      %p114 = por %p112, %p113
      %s116 = sadd.s32 %s115, 1
      %p119 = scmp.eq.s32.totalorder %s18, 3
      %p120 = scmp.ne.s32.totalorder %s115, %s117
      %p121 = scmp.eq.s32.totalorder %s18, 0
      %p122 = por %p120, %p121
      %p123 = scmp.ne.s32.totalorder %s115, %s117
      %p124 = scmp.eq.s32.totalorder %s23, 3
      %p125 = por %p123, %p124
      %p126 = scmp.ne.s32.totalorder %s117, %s118
      %p127 = scmp.eq.s32.totalorder %s23, 0
      %p128 = por %p126, %p127
      %p129 = scmp.ne.s32.totalorder %s117, %s118
      %p130 = scmp.eq.s32.totalorder %s24, 3
      %p131 = por %p129, %p130
      %p133 = scmp.ne.s32.totalorder %s118, %s132
      %p134 = scmp.eq.s32.totalorder %s24, 0
      %p135 = por %p133, %p134
      %s137 = sadd.s32 %s136, 1
      %p140 = scmp.eq.s32.totalorder %s18, 3
      %p141 = scmp.ne.s32.totalorder %s136, %s138
      %p142 = scmp.eq.s32.totalorder %s18, 0
      %p143 = por %p141, %p142
      %p144 = scmp.ne.s32.totalorder %s136, %s138
      %p145 = scmp.eq.s32.totalorder %s23, 3
      %p146 = por %p144, %p145
      %p147 = scmp.ne.s32.totalorder %s138, %s139
      %p148 = scmp.eq.s32.totalorder %s23, 0
      %p149 = por %p147, %p148
      %p150 = scmp.ne.s32.totalorder %s138, %s139
      %p151 = scmp.eq.s32.totalorder %s24, 3
      %p152 = por %p150, %p151
      %p154 = scmp.ne.s32.totalorder %s139, %s153
      %p155 = scmp.eq.s32.totalorder %s24, 0
      %p156 = por %p154, %p155
      %s158 = sadd.s32 %s157, 1
      %p161 = scmp.eq.s32.totalorder %s18, 3
      %p162 = scmp.ne.s32.totalorder %s157, %s159
      %p163 = scmp.eq.s32.totalorder %s18, 0
      %p164 = por %p162, %p163
      %p165 = scmp.ne.s32.totalorder %s157, %s159
      %p166 = scmp.eq.s32.totalorder %s23, 3
      %p167 = por %p165, %p166
      %p168 = scmp.ne.s32.totalorder %s159, %s160
      %p169 = scmp.eq.s32.totalorder %s23, 0
      %p170 = por %p168, %p169
      %p171 = scmp.ne.s32.totalorder %s159, %s160
      %p172 = scmp.eq.s32.totalorder %s24, 3
      %p173 = por %p171, %p172
      %p175 = scmp.ne.s32.totalorder %s160, %s174
      %p176 = scmp.eq.s32.totalorder %s24, 0
      %p177 = por %p175, %p176
      %s179 = sadd.s32 %s178, 1
      %p182 = scmp.eq.s32.totalorder %s18, 3
      %p183 = scmp.ne.s32.totalorder %s178, %s180
      %p184 = scmp.eq.s32.totalorder %s18, 0
      %p185 = por %p183, %p184
      %p186 = scmp.ne.s32.totalorder %s178, %s180
      %p187 = scmp.eq.s32.totalorder %s23, 3
      %p188 = por %p186, %p187
      %p189 = scmp.ne.s32.totalorder %s180, %s181
      %p190 = scmp.eq.s32.totalorder %s23, 0
      %p191 = por %p189, %p190
      %p192 = scmp.ne.s32.totalorder %s180, %s181
      %p193 = scmp.eq.s32.totalorder %s24, 3
      %p194 = por %p192, %p193
      %p196 = scmp.ne.s32.totalorder %s181, %s195
      %p197 = scmp.eq.s32.totalorder %s24, 0
      %p198 = por %p196, %p197
      %s200 = sadd.s32 %s199, 1
      %p203 = scmp.eq.s32.totalorder %s18, 3
      %p204 = scmp.ne.s32.totalorder %s199, %s201
      %p205 = scmp.eq.s32.totalorder %s18, 0
      %p206 = por %p204, %p205
      %p207 = scmp.ne.s32.totalorder %s199, %s201
      %p208 = scmp.eq.s32.totalorder %s23, 3
      %p209 = por %p207, %p208
      %p210 = scmp.ne.s32.totalorder %s201, %s202
      %p211 = scmp.eq.s32.totalorder %s23, 0
      %p212 = por %p210, %p211
      %p213 = scmp.ne.s32.totalorder %s201, %s202
      %p214 = scmp.eq.s32.totalorder %s24, 3
      %p215 = por %p213, %p214
      %p217 = scmp.ne.s32.totalorder %s202, %s216
      %p218 = scmp.eq.s32.totalorder %s24, 0
      %p219 = por %p217, %p218
      %s220 = ssub.s32 %s18, %s25
      %p221 = scmp.eq.s32.totalorder %s220, 0
      %s223 = sadd.s32 %s222, 1
      %s224 = scalar_select %p221, %s222, %s223
      %p227 = pneg %p221
      %p228 = scmp.eq.s32.totalorder %s18, 3
      %p229 = por %p227, %p228
      %p230 = scmp.ne.s32.totalorder %s222, %s225
      %p231 = scmp.eq.s32.totalorder %s18, 0
      %p232 = por %p230, %p231
      %p233 = scmp.ne.s32.totalorder %s222, %s225
      %p234 = scmp.eq.s32.totalorder %s23, 3
      %p235 = por %p233, %p234
      %p236 = scmp.ne.s32.totalorder %s225, %s226
      %p237 = scmp.eq.s32.totalorder %s23, 0
      %p238 = por %p236, %p237
      %p239 = scmp.ne.s32.totalorder %s225, %s226
      %p240 = scmp.eq.s32.totalorder %s24, 3
      %p241 = por %p239, %p240
      %p243 = scmp.ne.s32.totalorder %s226, %s242
      %p244 = scmp.eq.s32.totalorder %s24, 0
      %p245 = por %p243, %p244
      %p246 = scmp.le.s32.totalorder 1, %s18
      %p247 = scmp.lt.s32.totalorder %s18, 5
      %p248 = pnand %p246, %p247
      %p249 = pneg %p248
      // Predicated region
      $region9: #{mlp_forward.1} parent=5 // pred_check
        _
      $region10: #{mlp_forward.1} parent=5 // pred_check_branch
        %251 = sbr.rel (%p248) target = $region12
      $region11: #{mlp_forward.1} parent=5 // pred_region
        %s252 = ssub.s32 %s18, 1
        // Predicated region
        $region13: #{mlp_forward.1} parent=11 // pred_check
          %p253 = pneg %p65
        $region14: #{mlp_forward.1} parent=11 // pred_check_branch
          %255 = sbr.rel (%p253) target = $region16
        $region15: #{mlp_forward.1} parent=11 // pred_region
          _
        $region16: #{mlp_forward.1} parent=11 // pred_fallthru
          _
        // Predicated region
        $region17: #{mlp_forward.1} parent=11 // pred_check
          %p256 = pneg %p86
        $region18: #{mlp_forward.1} parent=11 // pred_check_branch
          %258 = sbr.rel (%p256) target = $region20
        $region19: #{mlp_forward.1} parent=11 // pred_region
          _
        $region20: #{mlp_forward.1} parent=11 // pred_fallthru
          _
        // Predicated region
        $region21: #{mlp_forward.1} parent=11 // pred_check
          %p259 = pneg %p107
        $region22: #{mlp_forward.1} parent=11 // pred_check_branch
          %261 = sbr.rel (%p259) target = $region24
        $region23: #{mlp_forward.1} parent=11 // pred_region
          _
        $region24: #{mlp_forward.1} parent=11 // pred_fallthru
          _
        // Predicated region
        $region25: #{mlp_forward.1} parent=11 // pred_check
          %p262 = pneg %p128
        $region26: #{mlp_forward.1} parent=11 // pred_check_branch
          %264 = sbr.rel (%p262) target = $region28
        $region27: #{mlp_forward.1} parent=11 // pred_region
          _
        $region28: #{mlp_forward.1} parent=11 // pred_fallthru
          _
        // Predicated region
        $region29: #{mlp_forward.1} parent=11 // pred_check
          %p265 = pneg %p149
        $region30: #{mlp_forward.1} parent=11 // pred_check_branch
          %267 = sbr.rel (%p265) target = $region32
        $region31: #{mlp_forward.1} parent=11 // pred_region
          _
        $region32: #{mlp_forward.1} parent=11 // pred_fallthru
          _
        // Predicated region
        $region33: #{mlp_forward.1} parent=11 // pred_check
          %p268 = pneg %p170
        $region34: #{mlp_forward.1} parent=11 // pred_check_branch
          %270 = sbr.rel (%p268) target = $region36
        $region35: #{mlp_forward.1} parent=11 // pred_region
          _
        $region36: #{mlp_forward.1} parent=11 // pred_fallthru
          _
        // Predicated region
        $region37: #{mlp_forward.1} parent=11 // pred_check
          %p271 = pneg %p191
        $region38: #{mlp_forward.1} parent=11 // pred_check_branch
          %273 = sbr.rel (%p271) target = $region40
        $region39: #{mlp_forward.1} parent=11 // pred_region
          _
        $region40: #{mlp_forward.1} parent=11 // pred_fallthru
          _
        // Predicated region
        $region41: #{mlp_forward.1} parent=11 // pred_check
          %p274 = pneg %p212
        $region42: #{mlp_forward.1} parent=11 // pred_check_branch
          %276 = sbr.rel (%p274) target = $region44
        $region43: #{mlp_forward.1} parent=11 // pred_region
          _
        $region44: #{mlp_forward.1} parent=11 // pred_fallthru
          _
      $region12: #{mlp_forward.1} parent=5 // pred_fallthru
        _
      %p277 = scmp.lt.s32.totalorder %s18, 4
      // Predicated region
      $region45: #{mlp_forward.1} parent=5 // pred_check
        %p278 = pneg %p277
      $region46: #{mlp_forward.1} parent=5 // pred_check_branch
        %280 = sbr.rel (%p278) target = $region48
      $region47: #{mlp_forward.1} parent=5 // pred_region
        // Predicated region
        $region49: #{mlp_forward.1} parent=47 // pred_check
          %p281 = pneg %p38
        $region50: #{mlp_forward.1} parent=47 // pred_check_branch
          %283 = sbr.rel (%p281) target = $region52
        $region51: #{mlp_forward.1} parent=47 // pred_region
          %s284 = smul.u32 128, %s18
          %p285 = scmp.lt.s32.totalorder %s284, 511
          %s286 = scalar_select %p285, %s284, 511
          %s287 = smul.addr %s286, 8
          %s288 = scalar_lea.vmem %s0, %s287
          %s289 = smul.u32 128, %s18
        $region52: #{mlp_forward.1} parent=47 // pred_fallthru
          _
      $region48: #{mlp_forward.1} parent=5 // pred_fallthru
        _
      %p290 = scmp.le.s32.totalorder 1, %s18
      %p291 = scmp.lt.s32.totalorder %s18, 5
      %p292 = pnand %p290, %p291
      %p293 = pneg %p292
      // Predicated region
      $region53: #{mlp_forward.1} parent=5 // pred_check
        _
      $region54: #{mlp_forward.1} parent=5 // pred_check_branch
        %295 = sbr.rel (%p292) target = $region56
      $region55: #{mlp_forward.1} parent=5 // pred_region
        %s296 = ssub.s32 %s18, 1
        %s297 = smul.u32 128, %s23
        %p298 = scmp.lt.s32.totalorder %s297, 511
        %s299 = scalar_select %p298, %s297, 511
        %s300 = smul.addr %s299, 8
        %s301 = scalar_lea.vmem %s0, %s300
        %p302 = pneg %p44
        %p303 = pneg %p41
        %p304 = pneg %p65
        %p305 = pneg %p62
        %p306 = pneg %p86
        %p307 = pneg %p83
        %p308 = pneg %p107
        %p309 = pneg %p104
        %p310 = pneg %p128
        %p311 = pneg %p125
        %p312 = pneg %p149
        %p313 = pneg %p146
        %p314 = pneg %p170
        %p315 = pneg %p167
        %p316 = pneg %p191
        %p317 = pneg %p188
        %p318 = pneg %p212
        %p319 = pneg %p209
        %p320 = pneg %p238
        %p321 = pneg %p235
        %s322 = sand.u32 %s225, 1
        %s323 = scalar_lea.sflag [#allocation3], %s322
        %s324 = sand.u32 %s225, 1
        %s325 = smul.addr %s324, 256
        %s326 = scalar_lea.vmem [#allocation2], %s325
        %s327 = smul.u32 128, %s23
        %p328 = scmp.lt.s32.totalorder %s327, 511
        %s329 = scalar_select %p328, %s327, 511
        %s330 = smul.addr %s329, 8
        %s331 = scalar_lea.vmem %s0, %s330
        %s332 = smul.u32 128, %s23
        %s333 = smul.u32 8, %s23
        %v334 = vld [vmem:[%s1] sm:$0xff]
        %v335 = vld [vmem:[%s1 + $0x8] sm:$0xff]
        %v336 = vld [vmem:[%s2] sm:$0xff]
        %v337 = vld [vmem:[%s2 + $0x8] sm:$0xff]
        %v338 = vld [vmem:[%s3] sm:$0xff]
        %v339 = vld [vmem:[%s3 + $0x8] sm:$0xff]
        %v340 = vld [vmem:[%s4] sm:$0xff]
        %v341 = vld [vmem:[%s4 + $0x8] sm:$0xff]
        %v342 = vld [vmem:[%s4 + $0x10] sm:$0xff]
        %v343 = vld [vmem:[%s4 + $0x18] sm:$0xff]
        %v344 = vld [vmem:[%s5] sm:$0xff]
        %v345 = vld [vmem:[%s5 + $0x8] sm:$0xff]
        %v346 = vld [vmem:[%s6] sm:$0xff]
        %v347 = vld [vmem:[%s6 + $0x8] sm:$0xff]
        %v348 = vld [vmem:[%s7] sm:$0xff]
        %v349 = vld [vmem:[%s7 + $0x8] sm:$0xff]
        %v350 = vld [vmem:[%s8] sm:$0xff]
        %v351 = vld [vmem:[%s8 + $0x8] sm:$0xff]
        %v352 = vld [vmem:[%s8 + $0x10] sm:$0xff]
        %v353 = vld [vmem:[%s8 + $0x18] sm:$0xff]
        %v354 = vld [vmem:[%s331] sm:$0xff]
        %v355 = vld [vmem:[%s331 + $0x8] sm:$0xff]
        %v356 = vld [vmem:[%s331 + $0x10] sm:$0xff]
        %v357 = vld [vmem:[%s331 + $0x18] sm:$0xff]
        %v358 = vld [vmem:[%s331 + $0x20] sm:$0xff]
        %v359 = vld [vmem:[%s331 + $0x28] sm:$0xff]
        %v360 = vld [vmem:[%s331 + $0x30] sm:$0xff]
        %v361 = vld [vmem:[%s331 + $0x38] sm:$0xff]
        %v362 = vld [vmem:[%s331 + $0x40] sm:$0xff]
        %v363 = vld [vmem:[%s331 + $0x48] sm:$0xff]
        %v364 = vld [vmem:[%s331 + $0x50] sm:$0xff]
        %v365 = vld [vmem:[%s331 + $0x58] sm:$0xff]
        %v366 = vld [vmem:[%s331 + $0x60] sm:$0xff]
        %v367 = vld [vmem:[%s331 + $0x68] sm:$0xff]
        %v368 = vld [vmem:[%s331 + $0x70] sm:$0xff]
        %v369 = vld [vmem:[%s331 + $0x78] sm:$0xff]
        %v370 = vld [vmem:[%s331 + $0x80] sm:$0xff]
        %v371 = vld [vmem:[%s331 + $0x88] sm:$0xff]
        %v372 = vld [vmem:[%s331 + $0x90] sm:$0xff]
        %v373 = vld [vmem:[%s331 + $0x98] sm:$0xff]
        %v374 = vld [vmem:[%s331 + $0xa0] sm:$0xff]
        %v375 = vld [vmem:[%s331 + $0xa8] sm:$0xff]
        %v376 = vld [vmem:[%s331 + $0xb0] sm:$0xff]
        %v377 = vld [vmem:[%s331 + $0xb8] sm:$0xff]
        %v378 = vld [vmem:[%s331 + $0xc0] sm:$0xff]
        %v379 = vld [vmem:[%s331 + $0xc8] sm:$0xff]
        %v380 = vld [vmem:[%s331 + $0xd0] sm:$0xff]
        %v381 = vld [vmem:[%s331 + $0xd8] sm:$0xff]
        %v382 = vld [vmem:[%s331 + $0xe0] sm:$0xff]
        %v383 = vld [vmem:[%s331 + $0xe8] sm:$0xff]
        %v384 = vld [vmem:[%s331 + $0xf0] sm:$0xff]
        %v385 = vld [vmem:[%s331 + $0xf8] sm:$0xff]
        %v386 = vld [vmem:[%s331 + $0x100] sm:$0xff]
        %v387 = vld [vmem:[%s331 + $0x108] sm:$0xff]
        %v388 = vld [vmem:[%s331 + $0x110] sm:$0xff]
        %v389 = vld [vmem:[%s331 + $0x118] sm:$0xff]
        %v390 = vld [vmem:[%s331 + $0x120] sm:$0xff]
        %v391 = vld [vmem:[%s331 + $0x128] sm:$0xff]
        %v392 = vld [vmem:[%s331 + $0x130] sm:$0xff]
        %v393 = vld [vmem:[%s331 + $0x138] sm:$0xff]
        %v394 = vld [vmem:[%s331 + $0x140] sm:$0xff]
        %v395 = vld [vmem:[%s331 + $0x148] sm:$0xff]
        %v396 = vld [vmem:[%s331 + $0x150] sm:$0xff]
        %v397 = vld [vmem:[%s331 + $0x158] sm:$0xff]
        %v398 = vld [vmem:[%s331 + $0x160] sm:$0xff]
        %v399 = vld [vmem:[%s331 + $0x168] sm:$0xff]
        %v400 = vld [vmem:[%s331 + $0x170] sm:$0xff]
        %v401 = vld [vmem:[%s331 + $0x178] sm:$0xff]
        %v402 = vld [vmem:[%s331 + $0x180] sm:$0xff]
        %v403 = vld [vmem:[%s331 + $0x188] sm:$0xff]
        %v404 = vld [vmem:[%s331 + $0x190] sm:$0xff]
        %v405 = vld [vmem:[%s331 + $0x198] sm:$0xff]
        %v406 = vld [vmem:[%s331 + $0x1a0] sm:$0xff]
        %v407 = vld [vmem:[%s331 + $0x1a8] sm:$0xff]
        %v408 = vld [vmem:[%s331 + $0x1b0] sm:$0xff]
        %v409 = vld [vmem:[%s331 + $0x1b8] sm:$0xff]
        %v410 = vld [vmem:[%s331 + $0x1c0] sm:$0xff]
        %v411 = vld [vmem:[%s331 + $0x1c8] sm:$0xff]
        %v412 = vld [vmem:[%s331 + $0x1d0] sm:$0xff]
        %v413 = vld [vmem:[%s331 + $0x1d8] sm:$0xff]
        %v414 = vld [vmem:[%s331 + $0x1e0] sm:$0xff]
        %v415 = vld [vmem:[%s331 + $0x1e8] sm:$0xff]
        %v416 = vld [vmem:[%s331 + $0x1f0] sm:$0xff]
        %v417 = vld [vmem:[%s331 + $0x1f8] sm:$0xff]
        %419 = vset.pattern.permute.xlu0 0
        %420 = vperm.xlu0 %419, %v344
        %v421 = vpop.permute.xlu0 %420
        %424 = vset.pattern.permute.xlu0 0
        %425 = vperm.xlu0 %424, %v345
        %v426 = vpop.permute.xlu0 %425
        %vm428 = vcmask 261120
        %v430 = vsel %vm428, %v334, 0
        %v433 = vsel %vm428, %v335, 0
        %v436 = vsel %vm428, %v354, 0
        %v439 = vsel %vm428, %v355, 0
        %v442 = vsel %vm428, %v356, 0
        %v445 = vsel %vm428, %v357, 0
        %v448 = vsel %vm428, %v358, 0
        %v451 = vsel %vm428, %v359, 0
        %v454 = vsel %vm428, %v360, 0
        %v457 = vsel %vm428, %v361, 0
        %v460 = vsel %vm428, %v362, 0
        %v463 = vsel %vm428, %v363, 0
        %v466 = vsel %vm428, %v364, 0
        %v469 = vsel %vm428, %v365, 0
        %v472 = vsel %vm428, %v366, 0
        %v475 = vsel %vm428, %v367, 0
        %v478 = vsel %vm428, %v368, 0
        %v481 = vsel %vm428, %v369, 0
        %v484 = vsel %vm428, %v370, 0
        %v487 = vsel %vm428, %v371, 0
        %v490 = vsel %vm428, %v372, 0
        %v493 = vsel %vm428, %v373, 0
        %v496 = vsel %vm428, %v374, 0
        %v499 = vsel %vm428, %v375, 0
        %v502 = vsel %vm428, %v376, 0
        %v505 = vsel %vm428, %v377, 0
        %v508 = vsel %vm428, %v378, 0
        %v511 = vsel %vm428, %v379, 0
        %v514 = vsel %vm428, %v380, 0
        %v517 = vsel %vm428, %v381, 0
        %v520 = vsel %vm428, %v382, 0
        %v523 = vsel %vm428, %v383, 0
        %v526 = vsel %vm428, %v384, 0
        %v529 = vsel %vm428, %v385, 0
        %v532 = vsel %vm428, %v386, 0
        %v535 = vsel %vm428, %v387, 0
        %v538 = vsel %vm428, %v388, 0
        %v541 = vsel %vm428, %v389, 0
        %v544 = vsel %vm428, %v390, 0
        %v547 = vsel %vm428, %v391, 0
        %v550 = vsel %vm428, %v392, 0
        %v553 = vsel %vm428, %v393, 0
        %v556 = vsel %vm428, %v394, 0
        %v559 = vsel %vm428, %v395, 0
        %v562 = vsel %vm428, %v396, 0
        %v565 = vsel %vm428, %v397, 0
        %v568 = vsel %vm428, %v398, 0
        %v571 = vsel %vm428, %v399, 0
        %v574 = vsel %vm428, %v400, 0
        %v577 = vsel %vm428, %v401, 0
        %v580 = vsel %vm428, %v402, 0
        %v583 = vsel %vm428, %v403, 0
        %v586 = vsel %vm428, %v404, 0
        %v589 = vsel %vm428, %v405, 0
        %v592 = vsel %vm428, %v406, 0
        %v595 = vsel %vm428, %v407, 0
        %v598 = vsel %vm428, %v408, 0
        %v601 = vsel %vm428, %v409, 0
        %v604 = vsel %vm428, %v410, 0
        %v607 = vsel %vm428, %v411, 0
        %v610 = vsel %vm428, %v412, 0
        %v613 = vsel %vm428, %v413, 0
        %v616 = vsel %vm428, %v414, 0
        %v619 = vsel %vm428, %v415, 0
        %v622 = vsel %vm428, %v416, 0
        %v625 = vsel %vm428, %v417, 0
        %627 = vmatprep.subr.mxu0 0.0
        %628 = vmatpush1.xpose.msra.mxu0 %v436
        %629 = vmatprep.subr.mxu0 0.0
        %630 = vmatpush1.xpose.msra.mxu0 %v439
        %631 = vmatprep.subr.mxu0 0.0
        %632 = vmatpush1.xpose.msra.mxu0 %v442
        %633 = vmatprep.subr.mxu0 0.0
        %634 = vmatpush1.xpose.msra.mxu0 %v445
        %635 = vmatprep.subr.mxu0 0.0
        %636 = vmatpush1.xpose.msra.mxu0 %v448
        %637 = vmatprep.subr.mxu0 0.0
        %638 = vmatpush1.xpose.msra.mxu0 %v451
        %639 = vmatprep.subr.mxu0 0.0
        %640 = vmatpush1.xpose.msra.mxu0 %v454
        %641 = vmatprep.subr.mxu0 0.0
        %642 = vmatpush1.xpose.msra.mxu0 %v457
        %643 = vmatprep.subr.mxu0 0.0
        %644 = vmatpush1.xpose.msra.mxu0 %v460
        %645 = vmatprep.subr.mxu0 0.0
        %646 = vmatpush1.xpose.msra.mxu0 %v463
        %647 = vmatprep.subr.mxu0 0.0
        %648 = vmatpush1.xpose.msra.mxu0 %v466
        %649 = vmatprep.subr.mxu0 0.0
        %650 = vmatpush1.xpose.msra.mxu0 %v469
        %651 = vmatprep.subr.mxu0 0.0
        %652 = vmatpush1.xpose.msra.mxu0 %v472
        %653 = vmatprep.subr.mxu0 0.0
        %654 = vmatpush1.xpose.msra.mxu0 %v475
        %655 = vmatprep.subr.mxu0 0.0
        %656 = vmatpush1.xpose.msra.mxu0 %v478
        %657 = vmatprep.subr.mxu0 0.0
        %658 = vmatpush1.xpose.msra.mxu0 %v481
        %659 = vmatprep.subr.mxu0 0.0
        %660 = vmatpush1.xpose.msra.mxu0 %v484
        %661 = vmatprep.subr.mxu0 0.0
        %662 = vmatpush1.xpose.msra.mxu0 %v487
        %663 = vmatprep.subr.mxu0 0.0
        %664 = vmatpush1.xpose.msra.mxu0 %v490
        %665 = vmatprep.subr.mxu0 0.0
        %666 = vmatpush1.xpose.msra.mxu0 %v493
        %667 = vmatprep.subr.mxu0 0.0
        %668 = vmatpush1.xpose.msra.mxu0 %v496
        %669 = vmatprep.subr.mxu0 0.0
        %670 = vmatpush1.xpose.msra.mxu0 %v499
        %671 = vmatprep.subr.mxu0 0.0
        %672 = vmatpush1.xpose.msra.mxu0 %v502
        %673 = vmatprep.subr.mxu0 0.0
        %674 = vmatpush1.xpose.msra.mxu0 %v505
        %675 = vmatprep.subr.mxu0 0.0
        %676 = vmatpush1.xpose.msra.mxu0 %v508
        %677 = vmatprep.subr.mxu0 0.0
        %678 = vmatpush1.xpose.msra.mxu0 %v511
        %679 = vmatprep.subr.mxu0 0.0
        %680 = vmatpush1.xpose.msra.mxu0 %v514
        %681 = vmatprep.subr.mxu0 0.0
        %682 = vmatpush1.xpose.msra.mxu0 %v517
        %683 = vmatprep.subr.mxu0 0.0
        %684 = vmatpush1.xpose.msra.mxu0 %v520
        %685 = vmatprep.subr.mxu0 0.0
        %686 = vmatpush1.xpose.msra.mxu0 %v523
        %687 = vmatprep.subr.mxu0 0.0
        %688 = vmatpush1.xpose.msra.mxu0 %v526
        %689 = vmatprep.subr.mxu0 0.0
        %690 = vmatpush1.xpose.msra.mxu0 %v529
        %691 = vmatprep.mubr.f32.mxu0 0.0
        %692 = vmatmul.mubr.f32.gmra.mrb[0].mxu0 %v430
        %v693 = vpop.f32.mrb[0].mxu0
        %v694 = vadd.f32 %v421, %v693
        %v695 = vpop.f32.mrb[0].mxu0
        %v696 = vadd.f32 %v421, %v695
        %697 = vmatprep.mubr.f32.mxu0 0.0
        %698 = vmatmul.mubr.f32.gmra.mrb[0].mxu0 %v433
        %v699 = vpop.f32.mrb[0].mxu0
        %v700 = vadd.f32 %v426, %v699
        %v701 = vpop.f32.mrb[0].mxu0
        %v702 = vadd.f32 %v426, %v701
        %703 = vdwg.mxu0
        %704 = vmatprep.subr.mxu0 0.0
        %705 = vmatpush1.xpose.msra.mxu0 %v532
        %706 = vmatprep.subr.mxu0 0.0
        %707 = vmatpush1.xpose.msra.mxu0 %v535
        %708 = vmatprep.subr.mxu0 0.0
        %709 = vmatpush1.xpose.msra.mxu0 %v538
        %710 = vmatprep.subr.mxu0 0.0
        %711 = vmatpush1.xpose.msra.mxu0 %v541
        %712 = vmatprep.subr.mxu0 0.0
        %713 = vmatpush1.xpose.msra.mxu0 %v544
        %714 = vmatprep.subr.mxu0 0.0
        %715 = vmatpush1.xpose.msra.mxu0 %v547
        %716 = vmatprep.subr.mxu0 0.0
        %717 = vmatpush1.xpose.msra.mxu0 %v550
        %718 = vmatprep.subr.mxu0 0.0
        %719 = vmatpush1.xpose.msra.mxu0 %v553
        %720 = vmatprep.subr.mxu0 0.0
        %721 = vmatpush1.xpose.msra.mxu0 %v556
        %722 = vmatprep.subr.mxu0 0.0
        %723 = vmatpush1.xpose.msra.mxu0 %v559
        %724 = vmatprep.subr.mxu0 0.0
        %725 = vmatpush1.xpose.msra.mxu0 %v562
        %726 = vmatprep.subr.mxu0 0.0
        %727 = vmatpush1.xpose.msra.mxu0 %v565
        %728 = vmatprep.subr.mxu0 0.0
        %729 = vmatpush1.xpose.msra.mxu0 %v568
        %730 = vmatprep.subr.mxu0 0.0
        %731 = vmatpush1.xpose.msra.mxu0 %v571
        %732 = vmatprep.subr.mxu0 0.0
        %733 = vmatpush1.xpose.msra.mxu0 %v574
        %734 = vmatprep.subr.mxu0 0.0
        %735 = vmatpush1.xpose.msra.mxu0 %v577
        %736 = vmatprep.subr.mxu0 0.0
        %737 = vmatpush1.xpose.msra.mxu0 %v580
        %738 = vmatprep.subr.mxu0 0.0
        %739 = vmatpush1.xpose.msra.mxu0 %v583
        %740 = vmatprep.subr.mxu0 0.0
        %741 = vmatpush1.xpose.msra.mxu0 %v586
        %742 = vmatprep.subr.mxu0 0.0
        %743 = vmatpush1.xpose.msra.mxu0 %v589
        %744 = vmatprep.subr.mxu0 0.0
        %745 = vmatpush1.xpose.msra.mxu0 %v592
        %746 = vmatprep.subr.mxu0 0.0
        %747 = vmatpush1.xpose.msra.mxu0 %v595
        %748 = vmatprep.subr.mxu0 0.0
        %749 = vmatpush1.xpose.msra.mxu0 %v598
        %750 = vmatprep.subr.mxu0 0.0
        %751 = vmatpush1.xpose.msra.mxu0 %v601
        %752 = vmatprep.subr.mxu0 0.0
        %753 = vmatpush1.xpose.msra.mxu0 %v604
        %754 = vmatprep.subr.mxu0 0.0
        %755 = vmatpush1.xpose.msra.mxu0 %v607
        %756 = vmatprep.subr.mxu0 0.0
        %757 = vmatpush1.xpose.msra.mxu0 %v610
        %758 = vmatprep.subr.mxu0 0.0
        %759 = vmatpush1.xpose.msra.mxu0 %v613
        %760 = vmatprep.subr.mxu0 0.0
        %761 = vmatpush1.xpose.msra.mxu0 %v616
        %762 = vmatprep.subr.mxu0 0.0
        %763 = vmatpush1.xpose.msra.mxu0 %v619
        %764 = vmatprep.subr.mxu0 0.0
        %765 = vmatpush1.xpose.msra.mxu0 %v622
        %766 = vmatprep.subr.mxu0 0.0
        %767 = vmatpush1.xpose.msra.mxu0 %v625
        %768 = vmatprep.mubr.f32.mxu0 0.0
        %769 = vmatmul.mubr.f32.gmra.mrb[0].mxu0 %v430
        %v770 = vpop.f32.mrb[0].mxu0
        %v771 = vadd.f32 %v421, %v770
        %v772 = vpop.f32.mrb[0].mxu0
        %v773 = vadd.f32 %v421, %v772
        %774 = vmatprep.mubr.f32.mxu0 0.0
        %775 = vmatmul.mubr.f32.gmra.mrb[0].mxu0 %v433
        %v776 = vpop.f32.mrb[0].mxu0
        %v777 = vadd.f32 %v426, %v776
        %v778 = vpop.f32.mrb[0].mxu0
        %v779 = vadd.f32 %v426, %v778
        %780 = vdwg.mxu0
        %v781 = vtanh.pop %v694
        %v782 = vtanh.pop %v696
        %v783 = vtanh.pop %v771
        %v784 = vtanh.pop %v773
        %v785 = vtanh.pop %v700
        %v786 = vtanh.pop %v702
        %v787 = vtanh.pop %v777
        %v788 = vtanh.pop %v779
        %790 = vset.pattern.permute.xlu0 0
        %791 = vperm.xlu0 %790, %v346
        %v792 = vpop.permute.xlu0 %791
        %795 = vset.pattern.permute.xlu0 0
        %796 = vperm.xlu0 %795, %v347
        %v797 = vpop.permute.xlu0 %796
        %vm799 = vcmask 130048
        %v801 = vsel %vm799, %v336, 0
        %v804 = vsel %vm799, %v337, 0
        %806 = vmatprep.subr.mxu0 %v782
        %807 = vmatpush1.msra.mxu0 %v781
        %808 = vmatprep.subr.mxu0 %v786
        %809 = vmatpush1.msra.mxu0 %v785
        %810 = vmatprep.subr.mxu0 0.0
        %811 = vmatpush1.msra.mxu0 0.0
        %812 = vmatprep.subr.mxu0 0.0
        %813 = vmatpush1.msra.mxu0 0.0
        %814 = vmatprep.subr.mxu0 0.0
        %815 = vmatpush1.msra.mxu0 0.0
        %816 = vmatprep.subr.mxu0 0.0
        %817 = vmatpush1.msra.mxu0 0.0
        %818 = vmatprep.subr.mxu0 0.0
        %819 = vmatpush1.msra.mxu0 0.0
        %820 = vmatprep.subr.mxu0 0.0
        %821 = vmatpush1.msra.mxu0 0.0
        %822 = vmatprep.subr.mxu0 0.0
        %823 = vmatpush1.msra.mxu0 0.0
        %824 = vmatprep.subr.mxu0 0.0
        %825 = vmatpush1.msra.mxu0 0.0
        %826 = vmatprep.subr.mxu0 0.0
        %827 = vmatpush1.msra.mxu0 0.0
        %828 = vmatprep.subr.mxu0 0.0
        %829 = vmatpush1.msra.mxu0 0.0
        %830 = vmatprep.subr.mxu0 0.0
        %831 = vmatpush1.msra.mxu0 0.0
        %832 = vmatprep.subr.mxu0 0.0
        %833 = vmatpush1.msra.mxu0 0.0
        %834 = vmatprep.subr.mxu0 0.0
        %835 = vmatpush1.msra.mxu0 0.0
        %836 = vmatprep.subr.mxu0 0.0
        %837 = vmatpush1.msra.mxu0 0.0
        %838 = vmatprep.subr.mxu0 0.0
        %839 = vmatpush1.msra.mxu0 0.0
        %840 = vmatprep.subr.mxu0 0.0
        %841 = vmatpush1.msra.mxu0 0.0
        %842 = vmatprep.subr.mxu0 0.0
        %843 = vmatpush1.msra.mxu0 0.0
        %844 = vmatprep.subr.mxu0 0.0
        %845 = vmatpush1.msra.mxu0 0.0
        %846 = vmatprep.subr.mxu0 0.0
        %847 = vmatpush1.msra.mxu0 0.0
        %848 = vmatprep.subr.mxu0 0.0
        %849 = vmatpush1.msra.mxu0 0.0
        %850 = vmatprep.subr.mxu0 0.0
        %851 = vmatpush1.msra.mxu0 0.0
        %852 = vmatprep.subr.mxu0 0.0
        %853 = vmatpush1.msra.mxu0 0.0
        %854 = vmatprep.subr.mxu0 0.0
        %855 = vmatpush1.msra.mxu0 0.0
        %856 = vmatprep.subr.mxu0 0.0
        %857 = vmatpush1.msra.mxu0 0.0
        %858 = vmatprep.subr.mxu0 0.0
        %859 = vmatpush1.msra.mxu0 0.0
        %860 = vmatprep.subr.mxu0 0.0
        %861 = vmatpush1.msra.mxu0 0.0
        %862 = vmatprep.subr.mxu0 0.0
        %863 = vmatpush1.msra.mxu0 0.0
        %864 = vmatprep.subr.mxu0 0.0
        %865 = vmatpush1.msra.mxu0 0.0
        %866 = vmatprep.subr.mxu0 0.0
        %867 = vmatpush1.msra.mxu0 0.0
        %868 = vmatprep.subr.mxu0 0.0
        %869 = vmatpush1.msra.mxu0 0.0
        %870 = vmatprep.mubr.f32.mxu0 0.0
        %871 = vmatmul.mubr.f32.gmra.mrb[0].mxu0 %v801
        %v872 = vpop.f32.mrb[0].mxu0
        %v873 = vadd.f32 %v792, %v872
        %v874 = vpop.f32.mrb[0].mxu0
        %v875 = vadd.f32 %v792, %v874
        %876 = vmatprep.mubr.f32.mxu0 0.0
        %877 = vmatmul.mubr.f32.gmra.mrb[0].mxu0 %v804
        %v878 = vpop.f32.mrb[0].mxu0
        %v879 = vadd.f32 %v797, %v878
        %v880 = vpop.f32.mrb[0].mxu0
        %v881 = vadd.f32 %v797, %v880
        %882 = vdwg.mxu0
        %883 = vmatprep.subr.mxu0 %v784
        %884 = vmatpush1.msra.mxu0 %v783
        %885 = vmatprep.subr.mxu0 %v788
        %886 = vmatpush1.msra.mxu0 %v787
        %887 = vmatprep.subr.mxu0 0.0
        %888 = vmatpush1.msra.mxu0 0.0
        %889 = vmatprep.subr.mxu0 0.0
        %890 = vmatpush1.msra.mxu0 0.0
        %891 = vmatprep.subr.mxu0 0.0
        %892 = vmatpush1.msra.mxu0 0.0
        %893 = vmatprep.subr.mxu0 0.0
        %894 = vmatpush1.msra.mxu0 0.0
        %895 = vmatprep.subr.mxu0 0.0
        %896 = vmatpush1.msra.mxu0 0.0
        %897 = vmatprep.subr.mxu0 0.0
        %898 = vmatpush1.msra.mxu0 0.0
        %899 = vmatprep.subr.mxu0 0.0
        %900 = vmatpush1.msra.mxu0 0.0
        %901 = vmatprep.subr.mxu0 0.0
        %902 = vmatpush1.msra.mxu0 0.0
        %903 = vmatprep.subr.mxu0 0.0
        %904 = vmatpush1.msra.mxu0 0.0
        %905 = vmatprep.subr.mxu0 0.0
        %906 = vmatpush1.msra.mxu0 0.0
        %907 = vmatprep.subr.mxu0 0.0
        %908 = vmatpush1.msra.mxu0 0.0
        %909 = vmatprep.subr.mxu0 0.0
        %910 = vmatpush1.msra.mxu0 0.0
        %911 = vmatprep.subr.mxu0 0.0
        %912 = vmatpush1.msra.mxu0 0.0
        %913 = vmatprep.subr.mxu0 0.0
        %914 = vmatpush1.msra.mxu0 0.0
        %915 = vmatprep.subr.mxu0 0.0
        %916 = vmatpush1.msra.mxu0 0.0
        %917 = vmatprep.subr.mxu0 0.0
        %918 = vmatpush1.msra.mxu0 0.0
        %919 = vmatprep.subr.mxu0 0.0
        %920 = vmatpush1.msra.mxu0 0.0
        %921 = vmatprep.subr.mxu0 0.0
        %922 = vmatpush1.msra.mxu0 0.0
        %923 = vmatprep.subr.mxu0 0.0
        %924 = vmatpush1.msra.mxu0 0.0
        %925 = vmatprep.subr.mxu0 0.0
        %926 = vmatpush1.msra.mxu0 0.0
        %927 = vmatprep.subr.mxu0 0.0
        %928 = vmatpush1.msra.mxu0 0.0
        %929 = vmatprep.subr.mxu0 0.0
        %930 = vmatpush1.msra.mxu0 0.0
        %931 = vmatprep.subr.mxu0 0.0
        %932 = vmatpush1.msra.mxu0 0.0
        %933 = vmatprep.subr.mxu0 0.0
        %934 = vmatpush1.msra.mxu0 0.0
        %935 = vmatprep.subr.mxu0 0.0
        %936 = vmatpush1.msra.mxu0 0.0
        %937 = vmatprep.subr.mxu0 0.0
        %938 = vmatpush1.msra.mxu0 0.0
        %939 = vmatprep.subr.mxu0 0.0
        %940 = vmatpush1.msra.mxu0 0.0
        %941 = vmatprep.subr.mxu0 0.0
        %942 = vmatpush1.msra.mxu0 0.0
        %943 = vmatprep.subr.mxu0 0.0
        %944 = vmatpush1.msra.mxu0 0.0
        %945 = vmatprep.subr.mxu0 0.0
        %946 = vmatpush1.msra.mxu0 0.0
        %947 = vmatprep.mubr.f32.mxu0 0.0
        %948 = vmatmul.mubr.f32.gmra.mrb[0].mxu0 %v801
        %v949 = vpop.f32.mrb[0].mxu0
        %v950 = vadd.f32 %v792, %v949
        %v951 = vpop.f32.mrb[0].mxu0
        %v952 = vadd.f32 %v792, %v951
        %953 = vmatprep.mubr.f32.mxu0 0.0
        %954 = vmatmul.mubr.f32.gmra.mrb[0].mxu0 %v804
        %v955 = vpop.f32.mrb[0].mxu0
        %v956 = vadd.f32 %v797, %v955
        %v957 = vpop.f32.mrb[0].mxu0
        %v958 = vadd.f32 %v797, %v957
        %959 = vdwg.mxu0
        %v960 = vtanh.pop %v873
        %v961 = vtanh.pop %v875
        %v962 = vtanh.pop %v950
        %v963 = vtanh.pop %v952
        %v964 = vtanh.pop %v879
        %v965 = vtanh.pop %v881
        %v966 = vtanh.pop %v956
        %v967 = vtanh.pop %v958
        %969 = vset.pattern.permute.xlu0 0
        %970 = vperm.xlu0 %969, %v348
        %v971 = vpop.permute.xlu0 %970
        %974 = vset.pattern.permute.xlu0 0
        %975 = vperm.xlu0 %974, %v349
        %v976 = vpop.permute.xlu0 %975
        %v979 = vsel %vm799, %v338, 0
        %v982 = vsel %vm799, %v339, 0
        %984 = vmatprep.subr.mxu0 %v961
        %985 = vmatpush1.msra.mxu0 %v960
        %986 = vmatprep.subr.mxu0 %v965
        %987 = vmatpush1.msra.mxu0 %v964
        %988 = vmatprep.subr.mxu0 0.0
        %989 = vmatpush1.msra.mxu0 0.0
        %990 = vmatprep.subr.mxu0 0.0
        %991 = vmatpush1.msra.mxu0 0.0
        %992 = vmatprep.subr.mxu0 0.0
        %993 = vmatpush1.msra.mxu0 0.0
        %994 = vmatprep.subr.mxu0 0.0
        %995 = vmatpush1.msra.mxu0 0.0
        %996 = vmatprep.subr.mxu0 0.0
        %997 = vmatpush1.msra.mxu0 0.0
        %998 = vmatprep.subr.mxu0 0.0
        %999 = vmatpush1.msra.mxu0 0.0
        %1000 = vmatprep.subr.mxu0 0.0
        %1001 = vmatpush1.msra.mxu0 0.0
        %1002 = vmatprep.subr.mxu0 0.0
        %1003 = vmatpush1.msra.mxu0 0.0
        %1004 = vmatprep.subr.mxu0 0.0
        %1005 = vmatpush1.msra.mxu0 0.0
        %1006 = vmatprep.subr.mxu0 0.0
        %1007 = vmatpush1.msra.mxu0 0.0
        %1008 = vmatprep.subr.mxu0 0.0
        %1009 = vmatpush1.msra.mxu0 0.0
        %1010 = vmatprep.subr.mxu0 0.0
        %1011 = vmatpush1.msra.mxu0 0.0
        %1012 = vmatprep.subr.mxu0 0.0
        %1013 = vmatpush1.msra.mxu0 0.0
        %1014 = vmatprep.subr.mxu0 0.0
        %1015 = vmatpush1.msra.mxu0 0.0
        %1016 = vmatprep.subr.mxu0 0.0
        %1017 = vmatpush1.msra.mxu0 0.0
        %1018 = vmatprep.subr.mxu0 0.0
        %1019 = vmatpush1.msra.mxu0 0.0
        %1020 = vmatprep.subr.mxu0 0.0
        %1021 = vmatpush1.msra.mxu0 0.0
        %1022 = vmatprep.subr.mxu0 0.0
        %1023 = vmatpush1.msra.mxu0 0.0
        %1024 = vmatprep.subr.mxu0 0.0
        %1025 = vmatpush1.msra.mxu0 0.0
        %1026 = vmatprep.subr.mxu0 0.0
        %1027 = vmatpush1.msra.mxu0 0.0
        %1028 = vmatprep.subr.mxu0 0.0
        %1029 = vmatpush1.msra.mxu0 0.0
        %1030 = vmatprep.subr.mxu0 0.0
        %1031 = vmatpush1.msra.mxu0 0.0
        %1032 = vmatprep.subr.mxu0 0.0
        %1033 = vmatpush1.msra.mxu0 0.0
        %1034 = vmatprep.subr.mxu0 0.0
        %1035 = vmatpush1.msra.mxu0 0.0
        %1036 = vmatprep.subr.mxu0 0.0
        %1037 = vmatpush1.msra.mxu0 0.0
        %1038 = vmatprep.subr.mxu0 0.0
        %1039 = vmatpush1.msra.mxu0 0.0
        %1040 = vmatprep.subr.mxu0 0.0
        %1041 = vmatpush1.msra.mxu0 0.0
        %1042 = vmatprep.subr.mxu0 0.0
        %1043 = vmatpush1.msra.mxu0 0.0
        %1044 = vmatprep.subr.mxu0 0.0
        %1045 = vmatpush1.msra.mxu0 0.0
        %1046 = vmatprep.subr.mxu0 0.0
        %1047 = vmatpush1.msra.mxu0 0.0
        %1048 = vmatprep.mubr.f32.mxu0 0.0
        %1049 = vmatmul.mubr.f32.gmra.mrb[0].mxu0 %v979
        %v1050 = vpop.f32.mrb[0].mxu0
        %v1051 = vadd.f32 %v971, %v1050
        %v1052 = vpop.f32.mrb[0].mxu0
        %v1053 = vadd.f32 %v971, %v1052
        %1054 = vmatprep.mubr.f32.mxu0 0.0
        %1055 = vmatmul.mubr.f32.gmra.mrb[0].mxu0 %v982
        %v1056 = vpop.f32.mrb[0].mxu0
        %v1057 = vadd.f32 %v976, %v1056
        %v1058 = vpop.f32.mrb[0].mxu0
        %v1059 = vadd.f32 %v976, %v1058
        %1060 = vdwg.mxu0
        %1061 = vmatprep.subr.mxu0 %v963
        %1062 = vmatpush1.msra.mxu0 %v962
        %1063 = vmatprep.subr.mxu0 %v967
        %1064 = vmatpush1.msra.mxu0 %v966
        %1065 = vmatprep.subr.mxu0 0.0
        %1066 = vmatpush1.msra.mxu0 0.0
        %1067 = vmatprep.subr.mxu0 0.0
        %1068 = vmatpush1.msra.mxu0 0.0
        %1069 = vmatprep.subr.mxu0 0.0
        %1070 = vmatpush1.msra.mxu0 0.0
        %1071 = vmatprep.subr.mxu0 0.0
        %1072 = vmatpush1.msra.mxu0 0.0
        %1073 = vmatprep.subr.mxu0 0.0
        %1074 = vmatpush1.msra.mxu0 0.0
        %1075 = vmatprep.subr.mxu0 0.0
        %1076 = vmatpush1.msra.mxu0 0.0
        %1077 = vmatprep.subr.mxu0 0.0
        %1078 = vmatpush1.msra.mxu0 0.0
        %1079 = vmatprep.subr.mxu0 0.0
        %1080 = vmatpush1.msra.mxu0 0.0
        %1081 = vmatprep.subr.mxu0 0.0
        %1082 = vmatpush1.msra.mxu0 0.0
        %1083 = vmatprep.subr.mxu0 0.0
        %1084 = vmatpush1.msra.mxu0 0.0
        %1085 = vmatprep.subr.mxu0 0.0
        %1086 = vmatpush1.msra.mxu0 0.0
        %1087 = vmatprep.subr.mxu0 0.0
        %1088 = vmatpush1.msra.mxu0 0.0
        %1089 = vmatprep.subr.mxu0 0.0
        %1090 = vmatpush1.msra.mxu0 0.0
        %1091 = vmatprep.subr.mxu0 0.0
        %1092 = vmatpush1.msra.mxu0 0.0
        %1093 = vmatprep.subr.mxu0 0.0
        %1094 = vmatpush1.msra.mxu0 0.0
        %1095 = vmatprep.subr.mxu0 0.0
        %1096 = vmatpush1.msra.mxu0 0.0
        %1097 = vmatprep.subr.mxu0 0.0
        %1098 = vmatpush1.msra.mxu0 0.0
        %1099 = vmatprep.subr.mxu0 0.0
        %1100 = vmatpush1.msra.mxu0 0.0
        %1101 = vmatprep.subr.mxu0 0.0
        %1102 = vmatpush1.msra.mxu0 0.0
        %1103 = vmatprep.subr.mxu0 0.0
        %1104 = vmatpush1.msra.mxu0 0.0
        %1105 = vmatprep.subr.mxu0 0.0
        %1106 = vmatpush1.msra.mxu0 0.0
        %1107 = vmatprep.subr.mxu0 0.0
        %1108 = vmatpush1.msra.mxu0 0.0
        %1109 = vmatprep.subr.mxu0 0.0
        %1110 = vmatpush1.msra.mxu0 0.0
        %1111 = vmatprep.subr.mxu0 0.0
        %1112 = vmatpush1.msra.mxu0 0.0
        %1113 = vmatprep.subr.mxu0 0.0
        %1114 = vmatpush1.msra.mxu0 0.0
        %1115 = vmatprep.subr.mxu0 0.0
        %1116 = vmatpush1.msra.mxu0 0.0
        %1117 = vmatprep.subr.mxu0 0.0
        %1118 = vmatpush1.msra.mxu0 0.0
        %1119 = vmatprep.subr.mxu0 0.0
        %1120 = vmatpush1.msra.mxu0 0.0
        %1121 = vmatprep.subr.mxu0 0.0
        %1122 = vmatpush1.msra.mxu0 0.0
        %1123 = vmatprep.subr.mxu0 0.0
        %1124 = vmatpush1.msra.mxu0 0.0
        %1125 = vmatprep.mubr.f32.mxu0 0.0
        %1126 = vmatmul.mubr.f32.gmra.mrb[0].mxu0 %v979
        %v1127 = vpop.f32.mrb[0].mxu0
        %v1128 = vadd.f32 %v971, %v1127
        %v1129 = vpop.f32.mrb[0].mxu0
        %v1130 = vadd.f32 %v971, %v1129
        %1131 = vmatprep.mubr.f32.mxu0 0.0
        %1132 = vmatmul.mubr.f32.gmra.mrb[0].mxu0 %v982
        %v1133 = vpop.f32.mrb[0].mxu0
        %v1134 = vadd.f32 %v976, %v1133
        %v1135 = vpop.f32.mrb[0].mxu0
        %v1136 = vadd.f32 %v976, %v1135
        %1137 = vdwg.mxu0
        %v1138 = vtanh.pop %v1051
        %v1139 = vtanh.pop %v1053
        %v1140 = vtanh.pop %v1128
        %v1141 = vtanh.pop %v1130
        %v1142 = vtanh.pop %v1057
        %v1143 = vtanh.pop %v1059
        %v1144 = vtanh.pop %v1134
        %v1145 = vtanh.pop %v1136
        %1147 = vset.pattern.permute.xlu0 0
        %1148 = vperm.xlu0 %1147, %v350
        %v1149 = vpop.permute.xlu0 %1148
        %1152 = vset.pattern.permute.xlu0 0
        %1153 = vperm.xlu0 %1152, %v351
        %v1154 = vpop.permute.xlu0 %1153
        %1157 = vset.pattern.permute.xlu0 0
        %1158 = vperm.xlu0 %1157, %v352
        %v1159 = vpop.permute.xlu0 %1158
        %1162 = vset.pattern.permute.xlu0 0
        %1163 = vperm.xlu0 %1162, %v353
        %v1164 = vpop.permute.xlu0 %1163
        %v1167 = vsel %vm799, %v340, 0
        %v1170 = vsel %vm799, %v341, 0
        %v1173 = vsel %vm799, %v342, 0
        %v1176 = vsel %vm799, %v343, 0
        %1178 = vmatprep.subr.mxu0 %v1139
        %1179 = vmatpush1.msra.mxu0 %v1138
        %1180 = vmatprep.subr.mxu0 %v1143
        %1181 = vmatpush1.msra.mxu0 %v1142
        %1182 = vmatprep.subr.mxu0 0.0
        %1183 = vmatpush1.msra.mxu0 0.0
        %1184 = vmatprep.subr.mxu0 0.0
        %1185 = vmatpush1.msra.mxu0 0.0
        %1186 = vmatprep.subr.mxu0 0.0
        %1187 = vmatpush1.msra.mxu0 0.0
        %1188 = vmatprep.subr.mxu0 0.0
        %1189 = vmatpush1.msra.mxu0 0.0
        %1190 = vmatprep.subr.mxu0 0.0
        %1191 = vmatpush1.msra.mxu0 0.0
        %1192 = vmatprep.subr.mxu0 0.0
        %1193 = vmatpush1.msra.mxu0 0.0
        %1194 = vmatprep.subr.mxu0 0.0
        %1195 = vmatpush1.msra.mxu0 0.0
        %1196 = vmatprep.subr.mxu0 0.0
        %1197 = vmatpush1.msra.mxu0 0.0
        %1198 = vmatprep.subr.mxu0 0.0
        %1199 = vmatpush1.msra.mxu0 0.0
        %1200 = vmatprep.subr.mxu0 0.0
        %1201 = vmatpush1.msra.mxu0 0.0
        %1202 = vmatprep.subr.mxu0 0.0
        %1203 = vmatpush1.msra.mxu0 0.0
        %1204 = vmatprep.subr.mxu0 0.0
        %1205 = vmatpush1.msra.mxu0 0.0
        %1206 = vmatprep.subr.mxu0 0.0
        %1207 = vmatpush1.msra.mxu0 0.0
        %1208 = vmatprep.subr.mxu0 0.0
        %1209 = vmatpush1.msra.mxu0 0.0
        %1210 = vmatprep.subr.mxu0 0.0
        %1211 = vmatpush1.msra.mxu0 0.0
        %1212 = vmatprep.subr.mxu0 0.0
        %1213 = vmatpush1.msra.mxu0 0.0
        %1214 = vmatprep.subr.mxu0 0.0
        %1215 = vmatpush1.msra.mxu0 0.0
        %1216 = vmatprep.subr.mxu0 0.0
        %1217 = vmatpush1.msra.mxu0 0.0
        %1218 = vmatprep.subr.mxu0 0.0
        %1219 = vmatpush1.msra.mxu0 0.0
        %1220 = vmatprep.subr.mxu0 0.0
        %1221 = vmatpush1.msra.mxu0 0.0
        %1222 = vmatprep.subr.mxu0 0.0
        %1223 = vmatpush1.msra.mxu0 0.0
        %1224 = vmatprep.subr.mxu0 0.0
        %1225 = vmatpush1.msra.mxu0 0.0
        %1226 = vmatprep.subr.mxu0 0.0
        %1227 = vmatpush1.msra.mxu0 0.0
        %1228 = vmatprep.subr.mxu0 0.0
        %1229 = vmatpush1.msra.mxu0 0.0
        %1230 = vmatprep.subr.mxu0 0.0
        %1231 = vmatpush1.msra.mxu0 0.0
        %1232 = vmatprep.subr.mxu0 0.0
        %1233 = vmatpush1.msra.mxu0 0.0
        %1234 = vmatprep.subr.mxu0 0.0
        %1235 = vmatpush1.msra.mxu0 0.0
        %1236 = vmatprep.subr.mxu0 0.0
        %1237 = vmatpush1.msra.mxu0 0.0
        %1238 = vmatprep.subr.mxu0 0.0
        %1239 = vmatpush1.msra.mxu0 0.0
        %1240 = vmatprep.subr.mxu0 0.0
        %1241 = vmatpush1.msra.mxu0 0.0
        %1242 = vmatprep.mubr.f32.mxu0 0.0
        %1243 = vmatmul.mubr.f32.gmra.mrb[0].mxu0 %v1167
        %v1244 = vpop.f32.mrb[0].mxu0
        %v1245 = vadd.f32 %v1149, %v1244
        %v1246 = vpop.f32.mrb[0].mxu0
        %v1247 = vadd.f32 %v1149, %v1246
        %1248 = vmatprep.mubr.f32.mxu0 0.0
        %1249 = vmatmul.mubr.f32.gmra.mrb[0].mxu0 %v1170
        %v1250 = vpop.f32.mrb[0].mxu0
        %v1251 = vadd.f32 %v1154, %v1250
        %v1252 = vpop.f32.mrb[0].mxu0
        %v1253 = vadd.f32 %v1154, %v1252
        %1254 = vmatprep.mubr.f32.mxu0 0.0
        %1255 = vmatmul.mubr.f32.gmra.mrb[0].mxu0 %v1173
        %v1256 = vpop.f32.mrb[0].mxu0
        %v1257 = vadd.f32 %v1159, %v1256
        %v1258 = vpop.f32.mrb[0].mxu0
        %v1259 = vadd.f32 %v1159, %v1258
        %1260 = vmatprep.mubr.f32.mxu0 0.0
        %1261 = vmatmul.mubr.f32.gmra.mrb[0].mxu0 %v1176
        %v1262 = vpop.f32.mrb[0].mxu0
        %v1263 = vadd.f32 %v1164, %v1262
        %v1264 = vpop.f32.mrb[0].mxu0
        %v1265 = vadd.f32 %v1164, %v1264
        %1266 = vdwg.mxu0
        %1267 = vmatprep.subr.mxu0 %v1141
        %1268 = vmatpush1.msra.mxu0 %v1140
        %1269 = vmatprep.subr.mxu0 %v1145
        %1270 = vmatpush1.msra.mxu0 %v1144
        %1271 = vmatprep.subr.mxu0 0.0
        %1272 = vmatpush1.msra.mxu0 0.0
        %1273 = vmatprep.subr.mxu0 0.0
        %1274 = vmatpush1.msra.mxu0 0.0
        %1275 = vmatprep.subr.mxu0 0.0
        %1276 = vmatpush1.msra.mxu0 0.0
        %1277 = vmatprep.subr.mxu0 0.0
        %1278 = vmatpush1.msra.mxu0 0.0
        %1279 = vmatprep.subr.mxu0 0.0
        %1280 = vmatpush1.msra.mxu0 0.0
        %1281 = vmatprep.subr.mxu0 0.0
        %1282 = vmatpush1.msra.mxu0 0.0
        %1283 = vmatprep.subr.mxu0 0.0
        %1284 = vmatpush1.msra.mxu0 0.0
        %1285 = vmatprep.subr.mxu0 0.0
        %1286 = vmatpush1.msra.mxu0 0.0
        %1287 = vmatprep.subr.mxu0 0.0
        %1288 = vmatpush1.msra.mxu0 0.0
        %1289 = vmatprep.subr.mxu0 0.0
        %1290 = vmatpush1.msra.mxu0 0.0
        %1291 = vmatprep.subr.mxu0 0.0
        %1292 = vmatpush1.msra.mxu0 0.0
        %1293 = vmatprep.subr.mxu0 0.0
        %1294 = vmatpush1.msra.mxu0 0.0
        %1295 = vmatprep.subr.mxu0 0.0
        %1296 = vmatpush1.msra.mxu0 0.0
        %1297 = vmatprep.subr.mxu0 0.0
        %1298 = vmatpush1.msra.mxu0 0.0
        %1299 = vmatprep.subr.mxu0 0.0
        %1300 = vmatpush1.msra.mxu0 0.0
        %1301 = vmatprep.subr.mxu0 0.0
        %1302 = vmatpush1.msra.mxu0 0.0
        %1303 = vmatprep.subr.mxu0 0.0
        %1304 = vmatpush1.msra.mxu0 0.0
        %1305 = vmatprep.subr.mxu0 0.0
        %1306 = vmatpush1.msra.mxu0 0.0
        %1307 = vmatprep.subr.mxu0 0.0
        %1308 = vmatpush1.msra.mxu0 0.0
        %1309 = vmatprep.subr.mxu0 0.0
        %1310 = vmatpush1.msra.mxu0 0.0
        %1311 = vmatprep.subr.mxu0 0.0
        %1312 = vmatpush1.msra.mxu0 0.0
        %1313 = vmatprep.subr.mxu0 0.0
        %1314 = vmatpush1.msra.mxu0 0.0
        %1315 = vmatprep.subr.mxu0 0.0
        %1316 = vmatpush1.msra.mxu0 0.0
        %1317 = vmatprep.subr.mxu0 0.0
        %1318 = vmatpush1.msra.mxu0 0.0
        %1319 = vmatprep.subr.mxu0 0.0
        %1320 = vmatpush1.msra.mxu0 0.0
        %1321 = vmatprep.subr.mxu0 0.0
        %1322 = vmatpush1.msra.mxu0 0.0
        %1323 = vmatprep.subr.mxu0 0.0
        %1324 = vmatpush1.msra.mxu0 0.0
        %1325 = vmatprep.subr.mxu0 0.0
        %1326 = vmatpush1.msra.mxu0 0.0
        %1327 = vmatprep.subr.mxu0 0.0
        %1328 = vmatpush1.msra.mxu0 0.0
        %1329 = vmatprep.subr.mxu0 0.0
        %1330 = vmatpush1.msra.mxu0 0.0
        %1331 = vmatprep.mubr.f32.mxu0 0.0
        %1332 = vmatmul.mubr.f32.gmra.mrb[0].mxu0 %v1167
        %v1333 = vpop.f32.mrb[0].mxu0
        %v1334 = vadd.f32 %v1149, %v1333
        %v1335 = vpop.f32.mrb[0].mxu0
        %v1336 = vadd.f32 %v1149, %v1335
        %1337 = vmatprep.mubr.f32.mxu0 0.0
        %1338 = vmatmul.mubr.f32.gmra.mrb[0].mxu0 %v1170
        %v1339 = vpop.f32.mrb[0].mxu0
        %v1340 = vadd.f32 %v1154, %v1339
        %v1341 = vpop.f32.mrb[0].mxu0
        %v1342 = vadd.f32 %v1154, %v1341
        %1343 = vmatprep.mubr.f32.mxu0 0.0
        %1344 = vmatmul.mubr.f32.gmra.mrb[0].mxu0 %v1173
        %v1345 = vpop.f32.mrb[0].mxu0
        %v1346 = vadd.f32 %v1159, %v1345
        %v1347 = vpop.f32.mrb[0].mxu0
        %v1348 = vadd.f32 %v1159, %v1347
        %1349 = vmatprep.mubr.f32.mxu0 0.0
        %1350 = vmatmul.mubr.f32.gmra.mrb[0].mxu0 %v1176
        %v1351 = vpop.f32.mrb[0].mxu0
        %v1352 = vadd.f32 %v1164, %v1351
        %v1353 = vpop.f32.mrb[0].mxu0
        %v1354 = vadd.f32 %v1164, %v1353
        %1355 = vdwg.mxu0
        %1356 = vst [vmem:[%s326] sm:$0xff] %v1245
        %1357 = vst [vmem:[%s326 + $0x8] sm:$0xff] %v1247
        %1358 = vst [vmem:[%s326 + $0x10] sm:$0xff] %v1334
        %1359 = vst [vmem:[%s326 + $0x18] sm:$0xff] %v1336
        %1360 = vst [vmem:[%s326 + $0x40] sm:$0xff] %v1251
        %1361 = vst [vmem:[%s326 + $0x48] sm:$0xff] %v1253
        %1362 = vst [vmem:[%s326 + $0x50] sm:$0xff] %v1340
        %1363 = vst [vmem:[%s326 + $0x58] sm:$0xff] %v1342
        %1364 = vst [vmem:[%s326 + $0x80] sm:$0xff] %v1257
        %1365 = vst [vmem:[%s326 + $0x88] sm:$0xff] %v1259
        %1366 = vst [vmem:[%s326 + $0x90] sm:$0xff] %v1346
        %1367 = vst [vmem:[%s326 + $0x98] sm:$0xff] %v1348
        %1368 = vst [vmem:[%s326 + $0xc0] sm:$0xff] %v1263
        %1369 = vst [vmem:[%s326 + $0xc8] sm:$0xff] %v1265
        %1370 = vst [vmem:[%s326 + $0xd0] sm:$0xff] %v1352
        %1371 = vst [vmem:[%s326 + $0xd8] sm:$0xff] %v1354
        %s1372 = scalar_lea.vmem %s331, 512
        %v1373 = vld [vmem:[%s1372] sm:$0xff]
        %v1374 = vld [vmem:[%s1372 + $0x8] sm:$0xff]
        %v1375 = vld [vmem:[%s1372 + $0x10] sm:$0xff]
        %v1376 = vld [vmem:[%s1372 + $0x18] sm:$0xff]
        %v1377 = vld [vmem:[%s1372 + $0x20] sm:$0xff]
        %v1378 = vld [vmem:[%s1372 + $0x28] sm:$0xff]
        %v1379 = vld [vmem:[%s1372 + $0x30] sm:$0xff]
        %v1380 = vld [vmem:[%s1372 + $0x38] sm:$0xff]
        %v1381 = vld [vmem:[%s1372 + $0x40] sm:$0xff]
        %v1382 = vld [vmem:[%s1372 + $0x48] sm:$0xff]
        %v1383 = vld [vmem:[%s1372 + $0x50] sm:$0xff]
        %v1384 = vld [vmem:[%s1372 + $0x58] sm:$0xff]
        %v1385 = vld [vmem:[%s1372 + $0x60] sm:$0xff]
        %v1386 = vld [vmem:[%s1372 + $0x68] sm:$0xff]
        %v1387 = vld [vmem:[%s1372 + $0x70] sm:$0xff]
        %v1388 = vld [vmem:[%s1372 + $0x78] sm:$0xff]
        %v1389 = vld [vmem:[%s1372 + $0x80] sm:$0xff]
        %v1390 = vld [vmem:[%s1372 + $0x88] sm:$0xff]
        %v1391 = vld [vmem:[%s1372 + $0x90] sm:$0xff]
        %v1392 = vld [vmem:[%s1372 + $0x98] sm:$0xff]
        %v1393 = vld [vmem:[%s1372 + $0xa0] sm:$0xff]
        %v1394 = vld [vmem:[%s1372 + $0xa8] sm:$0xff]
        %v1395 = vld [vmem:[%s1372 + $0xb0] sm:$0xff]
        %v1396 = vld [vmem:[%s1372 + $0xb8] sm:$0xff]
        %v1397 = vld [vmem:[%s1372 + $0xc0] sm:$0xff]
        %v1398 = vld [vmem:[%s1372 + $0xc8] sm:$0xff]
        %v1399 = vld [vmem:[%s1372 + $0xd0] sm:$0xff]
        %v1400 = vld [vmem:[%s1372 + $0xd8] sm:$0xff]
        %v1401 = vld [vmem:[%s1372 + $0xe0] sm:$0xff]
        %v1402 = vld [vmem:[%s1372 + $0xe8] sm:$0xff]
        %v1403 = vld [vmem:[%s1372 + $0xf0] sm:$0xff]
        %v1404 = vld [vmem:[%s1372 + $0xf8] sm:$0xff]
        %v1405 = vld [vmem:[%s1372 + $0x100] sm:$0xff]
        %v1406 = vld [vmem:[%s1372 + $0x108] sm:$0xff]
        %v1407 = vld [vmem:[%s1372 + $0x110] sm:$0xff]
        %v1408 = vld [vmem:[%s1372 + $0x118] sm:$0xff]
        %v1409 = vld [vmem:[%s1372 + $0x120] sm:$0xff]
        %v1410 = vld [vmem:[%s1372 + $0x128] sm:$0xff]
        %v1411 = vld [vmem:[%s1372 + $0x130] sm:$0xff]
        %v1412 = vld [vmem:[%s1372 + $0x138] sm:$0xff]
        %v1413 = vld [vmem:[%s1372 + $0x140] sm:$0xff]
        %v1414 = vld [vmem:[%s1372 + $0x148] sm:$0xff]
        %v1415 = vld [vmem:[%s1372 + $0x150] sm:$0xff]
        %v1416 = vld [vmem:[%s1372 + $0x158] sm:$0xff]
        %v1417 = vld [vmem:[%s1372 + $0x160] sm:$0xff]
        %v1418 = vld [vmem:[%s1372 + $0x168] sm:$0xff]
        %v1419 = vld [vmem:[%s1372 + $0x170] sm:$0xff]
        %v1420 = vld [vmem:[%s1372 + $0x178] sm:$0xff]
        %v1421 = vld [vmem:[%s1372 + $0x180] sm:$0xff]
        %v1422 = vld [vmem:[%s1372 + $0x188] sm:$0xff]
        %v1423 = vld [vmem:[%s1372 + $0x190] sm:$0xff]
        %v1424 = vld [vmem:[%s1372 + $0x198] sm:$0xff]
        %v1425 = vld [vmem:[%s1372 + $0x1a0] sm:$0xff]
        %v1426 = vld [vmem:[%s1372 + $0x1a8] sm:$0xff]
        %v1427 = vld [vmem:[%s1372 + $0x1b0] sm:$0xff]
        %v1428 = vld [vmem:[%s1372 + $0x1b8] sm:$0xff]
        %v1429 = vld [vmem:[%s1372 + $0x1c0] sm:$0xff]
        %v1430 = vld [vmem:[%s1372 + $0x1c8] sm:$0xff]
        %v1431 = vld [vmem:[%s1372 + $0x1d0] sm:$0xff]
        %v1432 = vld [vmem:[%s1372 + $0x1d8] sm:$0xff]
        %v1433 = vld [vmem:[%s1372 + $0x1e0] sm:$0xff]
        %v1434 = vld [vmem:[%s1372 + $0x1e8] sm:$0xff]
        %v1435 = vld [vmem:[%s1372 + $0x1f0] sm:$0xff]
        %v1436 = vld [vmem:[%s1372 + $0x1f8] sm:$0xff]
        %v1438 = vsel %vm428, %v1373, 0
        %v1441 = vsel %vm428, %v1374, 0
        %v1444 = vsel %vm428, %v1375, 0
        %v1447 = vsel %vm428, %v1376, 0
        %v1450 = vsel %vm428, %v1377, 0
        %v1453 = vsel %vm428, %v1378, 0
        %v1456 = vsel %vm428, %v1379, 0
        %v1459 = vsel %vm428, %v1380, 0
        %v1462 = vsel %vm428, %v1381, 0
        %v1465 = vsel %vm428, %v1382, 0
        %v1468 = vsel %vm428, %v1383, 0
        %v1471 = vsel %vm428, %v1384, 0
        %v1474 = vsel %vm428, %v1385, 0
        %v1477 = vsel %vm428, %v1386, 0
        %v1480 = vsel %vm428, %v1387, 0
        %v1483 = vsel %vm428, %v1388, 0
        %v1486 = vsel %vm428, %v1389, 0
        %v1489 = vsel %vm428, %v1390, 0
        %v1492 = vsel %vm428, %v1391, 0
        %v1495 = vsel %vm428, %v1392, 0
        %v1498 = vsel %vm428, %v1393, 0
        %v1501 = vsel %vm428, %v1394, 0
        %v1504 = vsel %vm428, %v1395, 0
        %v1507 = vsel %vm428, %v1396, 0
        %v1510 = vsel %vm428, %v1397, 0
        %v1513 = vsel %vm428, %v1398, 0
        %v1516 = vsel %vm428, %v1399, 0
        %v1519 = vsel %vm428, %v1400, 0
        %v1522 = vsel %vm428, %v1401, 0
        %v1525 = vsel %vm428, %v1402, 0
        %v1528 = vsel %vm428, %v1403, 0
        %v1531 = vsel %vm428, %v1404, 0
        %v1534 = vsel %vm428, %v1405, 0
        %v1537 = vsel %vm428, %v1406, 0
        %v1540 = vsel %vm428, %v1407, 0
        %v1543 = vsel %vm428, %v1408, 0
        %v1546 = vsel %vm428, %v1409, 0
        %v1549 = vsel %vm428, %v1410, 0
        %v1552 = vsel %vm428, %v1411, 0
        %v1555 = vsel %vm428, %v1412, 0
        %v1558 = vsel %vm428, %v1413, 0
        %v1561 = vsel %vm428, %v1414, 0
        %v1564 = vsel %vm428, %v1415, 0
        %v1567 = vsel %vm428, %v1416, 0
        %v1570 = vsel %vm428, %v1417, 0
        %v1573 = vsel %vm428, %v1418, 0
        %v1576 = vsel %vm428, %v1419, 0
        %v1579 = vsel %vm428, %v1420, 0
        %v1582 = vsel %vm428, %v1421, 0
        %v1585 = vsel %vm428, %v1422, 0
        %v1588 = vsel %vm428, %v1423, 0
        %v1591 = vsel %vm428, %v1424, 0
        %v1594 = vsel %vm428, %v1425, 0
        %v1597 = vsel %vm428, %v1426, 0
        %v1600 = vsel %vm428, %v1427, 0
        %v1603 = vsel %vm428, %v1428, 0
        %v1606 = vsel %vm428, %v1429, 0
        %v1609 = vsel %vm428, %v1430, 0
        %v1612 = vsel %vm428, %v1431, 0
        %v1615 = vsel %vm428, %v1432, 0
        %v1618 = vsel %vm428, %v1433, 0
        %v1621 = vsel %vm428, %v1434, 0
        %v1624 = vsel %vm428, %v1435, 0
        %v1627 = vsel %vm428, %v1436, 0
        %1629 = vmatprep.subr.mxu0 0.0
        %1630 = vmatpush1.xpose.msra.mxu0 %v1438
        %1631 = vmatprep.subr.mxu0 0.0
        %1632 = vmatpush1.xpose.msra.mxu0 %v1441
        %1633 = vmatprep.subr.mxu0 0.0
        %1634 = vmatpush1.xpose.msra.mxu0 %v1444
        %1635 = vmatprep.subr.mxu0 0.0
        %1636 = vmatpush1.xpose.msra.mxu0 %v1447
        %1637 = vmatprep.subr.mxu0 0.0
        %1638 = vmatpush1.xpose.msra.mxu0 %v1450
        %1639 = vmatprep.subr.mxu0 0.0
        %1640 = vmatpush1.xpose.msra.mxu0 %v1453
        %1641 = vmatprep.subr.mxu0 0.0
        %1642 = vmatpush1.xpose.msra.mxu0 %v1456
        %1643 = vmatprep.subr.mxu0 0.0
        %1644 = vmatpush1.xpose.msra.mxu0 %v1459
        %1645 = vmatprep.subr.mxu0 0.0
        %1646 = vmatpush1.xpose.msra.mxu0 %v1462
        %1647 = vmatprep.subr.mxu0 0.0
        %1648 = vmatpush1.xpose.msra.mxu0 %v1465
        %1649 = vmatprep.subr.mxu0 0.0
        %1650 = vmatpush1.xpose.msra.mxu0 %v1468
        %1651 = vmatprep.subr.mxu0 0.0
        %1652 = vmatpush1.xpose.msra.mxu0 %v1471
        %1653 = vmatprep.subr.mxu0 0.0
        %1654 = vmatpush1.xpose.msra.mxu0 %v1474
        %1655 = vmatprep.subr.mxu0 0.0
        %1656 = vmatpush1.xpose.msra.mxu0 %v1477
        %1657 = vmatprep.subr.mxu0 0.0
        %1658 = vmatpush1.xpose.msra.mxu0 %v1480
        %1659 = vmatprep.subr.mxu0 0.0
        %1660 = vmatpush1.xpose.msra.mxu0 %v1483
        %1661 = vmatprep.subr.mxu0 0.0
        %1662 = vmatpush1.xpose.msra.mxu0 %v1486
        %1663 = vmatprep.subr.mxu0 0.0
        %1664 = vmatpush1.xpose.msra.mxu0 %v1489
        %1665 = vmatprep.subr.mxu0 0.0
        %1666 = vmatpush1.xpose.msra.mxu0 %v1492
        %1667 = vmatprep.subr.mxu0 0.0
        %1668 = vmatpush1.xpose.msra.mxu0 %v1495
        %1669 = vmatprep.subr.mxu0 0.0
        %1670 = vmatpush1.xpose.msra.mxu0 %v1498
        %1671 = vmatprep.subr.mxu0 0.0
        %1672 = vmatpush1.xpose.msra.mxu0 %v1501
        %1673 = vmatprep.subr.mxu0 0.0
        %1674 = vmatpush1.xpose.msra.mxu0 %v1504
        %1675 = vmatprep.subr.mxu0 0.0
        %1676 = vmatpush1.xpose.msra.mxu0 %v1507
        %1677 = vmatprep.subr.mxu0 0.0
        %1678 = vmatpush1.xpose.msra.mxu0 %v1510
        %1679 = vmatprep.subr.mxu0 0.0
        %1680 = vmatpush1.xpose.msra.mxu0 %v1513
        %1681 = vmatprep.subr.mxu0 0.0
        %1682 = vmatpush1.xpose.msra.mxu0 %v1516
        %1683 = vmatprep.subr.mxu0 0.0
        %1684 = vmatpush1.xpose.msra.mxu0 %v1519
        %1685 = vmatprep.subr.mxu0 0.0
        %1686 = vmatpush1.xpose.msra.mxu0 %v1522
        %1687 = vmatprep.subr.mxu0 0.0
        %1688 = vmatpush1.xpose.msra.mxu0 %v1525
        %1689 = vmatprep.subr.mxu0 0.0
        %1690 = vmatpush1.xpose.msra.mxu0 %v1528
        %1691 = vmatprep.subr.mxu0 0.0
        %1692 = vmatpush1.xpose.msra.mxu0 %v1531
        %1693 = vmatprep.mubr.f32.mxu0 0.0
        %1694 = vmatmul.mubr.f32.gmra.mrb[0].mxu0 %v430
        %v1695 = vpop.f32.mrb[0].mxu0
        %v1696 = vadd.f32 %v421, %v1695
        %v1697 = vpop.f32.mrb[0].mxu0
        %v1698 = vadd.f32 %v421, %v1697
        %1699 = vmatprep.mubr.f32.mxu0 0.0
        %1700 = vmatmul.mubr.f32.gmra.mrb[0].mxu0 %v433
        %v1701 = vpop.f32.mrb[0].mxu0
        %v1702 = vadd.f32 %v426, %v1701
        %v1703 = vpop.f32.mrb[0].mxu0
        %v1704 = vadd.f32 %v426, %v1703
        %1705 = vdwg.mxu0
        %1706 = vmatprep.subr.mxu0 0.0
        %1707 = vmatpush1.xpose.msra.mxu0 %v1534
        %1708 = vmatprep.subr.mxu0 0.0
        %1709 = vmatpush1.xpose.msra.mxu0 %v1537
        %1710 = vmatprep.subr.mxu0 0.0
        %1711 = vmatpush1.xpose.msra.mxu0 %v1540
        %1712 = vmatprep.subr.mxu0 0.0
        %1713 = vmatpush1.xpose.msra.mxu0 %v1543
        %1714 = vmatprep.subr.mxu0 0.0
        %1715 = vmatpush1.xpose.msra.mxu0 %v1546
        %1716 = vmatprep.subr.mxu0 0.0
        %1717 = vmatpush1.xpose.msra.mxu0 %v1549
        %1718 = vmatprep.subr.mxu0 0.0
        %1719 = vmatpush1.xpose.msra.mxu0 %v1552
        %1720 = vmatprep.subr.mxu0 0.0
        %1721 = vmatpush1.xpose.msra.mxu0 %v1555
        %1722 = vmatprep.subr.mxu0 0.0
        %1723 = vmatpush1.xpose.msra.mxu0 %v1558
        %1724 = vmatprep.subr.mxu0 0.0
        %1725 = vmatpush1.xpose.msra.mxu0 %v1561
        %1726 = vmatprep.subr.mxu0 0.0
        %1727 = vmatpush1.xpose.msra.mxu0 %v1564
        %1728 = vmatprep.subr.mxu0 0.0
        %1729 = vmatpush1.xpose.msra.mxu0 %v1567
        %1730 = vmatprep.subr.mxu0 0.0
        %1731 = vmatpush1.xpose.msra.mxu0 %v1570
        %1732 = vmatprep.subr.mxu0 0.0
        %1733 = vmatpush1.xpose.msra.mxu0 %v1573
        %1734 = vmatprep.subr.mxu0 0.0
        %1735 = vmatpush1.xpose.msra.mxu0 %v1576
        %1736 = vmatprep.subr.mxu0 0.0
        %1737 = vmatpush1.xpose.msra.mxu0 %v1579
        %1738 = vmatprep.subr.mxu0 0.0
        %1739 = vmatpush1.xpose.msra.mxu0 %v1582
        %1740 = vmatprep.subr.mxu0 0.0
        %1741 = vmatpush1.xpose.msra.mxu0 %v1585
        %1742 = vmatprep.subr.mxu0 0.0
        %1743 = vmatpush1.xpose.msra.mxu0 %v1588
        %1744 = vmatprep.subr.mxu0 0.0
        %1745 = vmatpush1.xpose.msra.mxu0 %v1591
        %1746 = vmatprep.subr.mxu0 0.0
        %1747 = vmatpush1.xpose.msra.mxu0 %v1594
        %1748 = vmatprep.subr.mxu0 0.0
        %1749 = vmatpush1.xpose.msra.mxu0 %v1597
        %1750 = vmatprep.subr.mxu0 0.0
        %1751 = vmatpush1.xpose.msra.mxu0 %v1600
        %1752 = vmatprep.subr.mxu0 0.0
        %1753 = vmatpush1.xpose.msra.mxu0 %v1603
        %1754 = vmatprep.subr.mxu0 0.0
        %1755 = vmatpush1.xpose.msra.mxu0 %v1606
        %1756 = vmatprep.subr.mxu0 0.0
        %1757 = vmatpush1.xpose.msra.mxu0 %v1609
        %1758 = vmatprep.subr.mxu0 0.0
        %1759 = vmatpush1.xpose.msra.mxu0 %v1612
        %1760 = vmatprep.subr.mxu0 0.0
        %1761 = vmatpush1.xpose.msra.mxu0 %v1615
        %1762 = vmatprep.subr.mxu0 0.0
        %1763 = vmatpush1.xpose.msra.mxu0 %v1618
        %1764 = vmatprep.subr.mxu0 0.0
        %1765 = vmatpush1.xpose.msra.mxu0 %v1621
        %1766 = vmatprep.subr.mxu0 0.0
        %1767 = vmatpush1.xpose.msra.mxu0 %v1624
        %1768 = vmatprep.subr.mxu0 0.0
        %1769 = vmatpush1.xpose.msra.mxu0 %v1627
        %1770 = vmatprep.mubr.f32.mxu0 0.0
        %1771 = vmatmul.mubr.f32.gmra.mrb[0].mxu0 %v430
        %v1772 = vpop.f32.mrb[0].mxu0
        %v1773 = vadd.f32 %v421, %v1772
        %v1774 = vpop.f32.mrb[0].mxu0
        %v1775 = vadd.f32 %v421, %v1774
        %1776 = vmatprep.mubr.f32.mxu0 0.0
        %1777 = vmatmul.mubr.f32.gmra.mrb[0].mxu0 %v433
        %v1778 = vpop.f32.mrb[0].mxu0
        %v1779 = vadd.f32 %v426, %v1778
        %v1780 = vpop.f32.mrb[0].mxu0
        %v1781 = vadd.f32 %v426, %v1780
        %1782 = vdwg.mxu0
        %v1783 = vtanh.pop %v1696
        %v1784 = vtanh.pop %v1698
        %v1785 = vtanh.pop %v1773
        %v1786 = vtanh.pop %v1775
        %v1787 = vtanh.pop %v1702
        %v1788 = vtanh.pop %v1704
        %v1789 = vtanh.pop %v1779
        %v1790 = vtanh.pop %v1781
        %1791 = vmatprep.subr.mxu0 %v1784
        %1792 = vmatpush1.msra.mxu0 %v1783
        %1793 = vmatprep.subr.mxu0 %v1788
        %1794 = vmatpush1.msra.mxu0 %v1787
        %1795 = vmatprep.subr.mxu0 0.0
        %1796 = vmatpush1.msra.mxu0 0.0
        %1797 = vmatprep.subr.mxu0 0.0
        %1798 = vmatpush1.msra.mxu0 0.0
        %1799 = vmatprep.subr.mxu0 0.0
        %1800 = vmatpush1.msra.mxu0 0.0
        %1801 = vmatprep.subr.mxu0 0.0
        %1802 = vmatpush1.msra.mxu0 0.0
        %1803 = vmatprep.subr.mxu0 0.0
        %1804 = vmatpush1.msra.mxu0 0.0
        %1805 = vmatprep.subr.mxu0 0.0
        %1806 = vmatpush1.msra.mxu0 0.0
        %1807 = vmatprep.subr.mxu0 0.0
        %1808 = vmatpush1.msra.mxu0 0.0
        %1809 = vmatprep.subr.mxu0 0.0
        %1810 = vmatpush1.msra.mxu0 0.0
        %1811 = vmatprep.subr.mxu0 0.0
        %1812 = vmatpush1.msra.mxu0 0.0
        %1813 = vmatprep.subr.mxu0 0.0
        %1814 = vmatpush1.msra.mxu0 0.0
        %1815 = vmatprep.subr.mxu0 0.0
        %1816 = vmatpush1.msra.mxu0 0.0
        %1817 = vmatprep.subr.mxu0 0.0
        %1818 = vmatpush1.msra.mxu0 0.0
        %1819 = vmatprep.subr.mxu0 0.0
        %1820 = vmatpush1.msra.mxu0 0.0
        %1821 = vmatprep.subr.mxu0 0.0
        %1822 = vmatpush1.msra.mxu0 0.0
        %1823 = vmatprep.subr.mxu0 0.0
        %1824 = vmatpush1.msra.mxu0 0.0
        %1825 = vmatprep.subr.mxu0 0.0
        %1826 = vmatpush1.msra.mxu0 0.0
        %1827 = vmatprep.subr.mxu0 0.0
        %1828 = vmatpush1.msra.mxu0 0.0
        %1829 = vmatprep.subr.mxu0 0.0
        %1830 = vmatpush1.msra.mxu0 0.0
        %1831 = vmatprep.subr.mxu0 0.0
        %1832 = vmatpush1.msra.mxu0 0.0
        %1833 = vmatprep.subr.mxu0 0.0
        %1834 = vmatpush1.msra.mxu0 0.0
        %1835 = vmatprep.subr.mxu0 0.0
        %1836 = vmatpush1.msra.mxu0 0.0
        %1837 = vmatprep.subr.mxu0 0.0
        %1838 = vmatpush1.msra.mxu0 0.0
        %1839 = vmatprep.subr.mxu0 0.0
        %1840 = vmatpush1.msra.mxu0 0.0
        %1841 = vmatprep.subr.mxu0 0.0
        %1842 = vmatpush1.msra.mxu0 0.0
        %1843 = vmatprep.subr.mxu0 0.0
        %1844 = vmatpush1.msra.mxu0 0.0
        %1845 = vmatprep.subr.mxu0 0.0
        %1846 = vmatpush1.msra.mxu0 0.0
        %1847 = vmatprep.subr.mxu0 0.0
        %1848 = vmatpush1.msra.mxu0 0.0
        %1849 = vmatprep.subr.mxu0 0.0
        %1850 = vmatpush1.msra.mxu0 0.0
        %1851 = vmatprep.subr.mxu0 0.0
        %1852 = vmatpush1.msra.mxu0 0.0
        %1853 = vmatprep.subr.mxu0 0.0
        %1854 = vmatpush1.msra.mxu0 0.0
        %1855 = vmatprep.mubr.f32.mxu0 0.0
        %1856 = vmatmul.mubr.f32.gmra.mrb[0].mxu0 %v801
        %v1857 = vpop.f32.mrb[0].mxu0
        %v1858 = vadd.f32 %v792, %v1857
        %v1859 = vpop.f32.mrb[0].mxu0
        %v1860 = vadd.f32 %v792, %v1859
        %1861 = vmatprep.mubr.f32.mxu0 0.0
        %1862 = vmatmul.mubr.f32.gmra.mrb[0].mxu0 %v804
        %v1863 = vpop.f32.mrb[0].mxu0
        %v1864 = vadd.f32 %v797, %v1863
        %v1865 = vpop.f32.mrb[0].mxu0
        %v1866 = vadd.f32 %v797, %v1865
        %1867 = vdwg.mxu0
        %1868 = vmatprep.subr.mxu0 %v1786
        %1869 = vmatpush1.msra.mxu0 %v1785
        %1870 = vmatprep.subr.mxu0 %v1790
        %1871 = vmatpush1.msra.mxu0 %v1789
        %1872 = vmatprep.subr.mxu0 0.0
        %1873 = vmatpush1.msra.mxu0 0.0
        %1874 = vmatprep.subr.mxu0 0.0
        %1875 = vmatpush1.msra.mxu0 0.0
        %1876 = vmatprep.subr.mxu0 0.0
        %1877 = vmatpush1.msra.mxu0 0.0
        %1878 = vmatprep.subr.mxu0 0.0
        %1879 = vmatpush1.msra.mxu0 0.0
        %1880 = vmatprep.subr.mxu0 0.0
        %1881 = vmatpush1.msra.mxu0 0.0
        %1882 = vmatprep.subr.mxu0 0.0
        %1883 = vmatpush1.msra.mxu0 0.0
        %1884 = vmatprep.subr.mxu0 0.0
        %1885 = vmatpush1.msra.mxu0 0.0
        %1886 = vmatprep.subr.mxu0 0.0
        %1887 = vmatpush1.msra.mxu0 0.0
        %1888 = vmatprep.subr.mxu0 0.0
        %1889 = vmatpush1.msra.mxu0 0.0
        %1890 = vmatprep.subr.mxu0 0.0
        %1891 = vmatpush1.msra.mxu0 0.0
        %1892 = vmatprep.subr.mxu0 0.0
        %1893 = vmatpush1.msra.mxu0 0.0
        %1894 = vmatprep.subr.mxu0 0.0
        %1895 = vmatpush1.msra.mxu0 0.0
        %1896 = vmatprep.subr.mxu0 0.0
        %1897 = vmatpush1.msra.mxu0 0.0
        %1898 = vmatprep.subr.mxu0 0.0
        %1899 = vmatpush1.msra.mxu0 0.0
        %1900 = vmatprep.subr.mxu0 0.0
        %1901 = vmatpush1.msra.mxu0 0.0
        %1902 = vmatprep.subr.mxu0 0.0
        %1903 = vmatpush1.msra.mxu0 0.0
        %1904 = vmatprep.subr.mxu0 0.0
        %1905 = vmatpush1.msra.mxu0 0.0
        %1906 = vmatprep.subr.mxu0 0.0
        %1907 = vmatpush1.msra.mxu0 0.0
        %1908 = vmatprep.subr.mxu0 0.0
        %1909 = vmatpush1.msra.mxu0 0.0
        %1910 = vmatprep.subr.mxu0 0.0
        %1911 = vmatpush1.msra.mxu0 0.0
        %1912 = vmatprep.subr.mxu0 0.0
        %1913 = vmatpush1.msra.mxu0 0.0
        %1914 = vmatprep.subr.mxu0 0.0
        %1915 = vmatpush1.msra.mxu0 0.0
        %1916 = vmatprep.subr.mxu0 0.0
        %1917 = vmatpush1.msra.mxu0 0.0
        %1918 = vmatprep.subr.mxu0 0.0
        %1919 = vmatpush1.msra.mxu0 0.0
        %1920 = vmatprep.subr.mxu0 0.0
        %1921 = vmatpush1.msra.mxu0 0.0
        %1922 = vmatprep.subr.mxu0 0.0
        %1923 = vmatpush1.msra.mxu0 0.0
        %1924 = vmatprep.subr.mxu0 0.0
        %1925 = vmatpush1.msra.mxu0 0.0
        %1926 = vmatprep.subr.mxu0 0.0
        %1927 = vmatpush1.msra.mxu0 0.0
        %1928 = vmatprep.subr.mxu0 0.0
        %1929 = vmatpush1.msra.mxu0 0.0
        %1930 = vmatprep.subr.mxu0 0.0
        %1931 = vmatpush1.msra.mxu0 0.0
        %1932 = vmatprep.mubr.f32.mxu0 0.0
        %1933 = vmatmul.mubr.f32.gmra.mrb[0].mxu0 %v801
        %v1934 = vpop.f32.mrb[0].mxu0
        %v1935 = vadd.f32 %v792, %v1934
        %v1936 = vpop.f32.mrb[0].mxu0
        %v1937 = vadd.f32 %v792, %v1936
        %1938 = vmatprep.mubr.f32.mxu0 0.0
        %1939 = vmatmul.mubr.f32.gmra.mrb[0].mxu0 %v804
        %v1940 = vpop.f32.mrb[0].mxu0
        %v1941 = vadd.f32 %v797, %v1940
        %v1942 = vpop.f32.mrb[0].mxu0
        %v1943 = vadd.f32 %v797, %v1942
        %1944 = vdwg.mxu0
        %v1945 = vtanh.pop %v1858
        %v1946 = vtanh.pop %v1860
        %v1947 = vtanh.pop %v1935
        %v1948 = vtanh.pop %v1937
        %v1949 = vtanh.pop %v1864
        %v1950 = vtanh.pop %v1866
        %v1951 = vtanh.pop %v1941
        %v1952 = vtanh.pop %v1943
        %1953 = vmatprep.subr.mxu0 %v1946
        %1954 = vmatpush1.msra.mxu0 %v1945
        %1955 = vmatprep.subr.mxu0 %v1950
        %1956 = vmatpush1.msra.mxu0 %v1949
        %1957 = vmatprep.subr.mxu0 0.0
        %1958 = vmatpush1.msra.mxu0 0.0
        %1959 = vmatprep.subr.mxu0 0.0
        %1960 = vmatpush1.msra.mxu0 0.0
        %1961 = vmatprep.subr.mxu0 0.0
        %1962 = vmatpush1.msra.mxu0 0.0
        %1963 = vmatprep.subr.mxu0 0.0
        %1964 = vmatpush1.msra.mxu0 0.0
        %1965 = vmatprep.subr.mxu0 0.0
        %1966 = vmatpush1.msra.mxu0 0.0
        %1967 = vmatprep.subr.mxu0 0.0
        %1968 = vmatpush1.msra.mxu0 0.0
        %1969 = vmatprep.subr.mxu0 0.0
        %1970 = vmatpush1.msra.mxu0 0.0
        %1971 = vmatprep.subr.mxu0 0.0
        %1972 = vmatpush1.msra.mxu0 0.0
        %1973 = vmatprep.subr.mxu0 0.0
        %1974 = vmatpush1.msra.mxu0 0.0
        %1975 = vmatprep.subr.mxu0 0.0
        %1976 = vmatpush1.msra.mxu0 0.0
        %1977 = vmatprep.subr.mxu0 0.0
        %1978 = vmatpush1.msra.mxu0 0.0
        %1979 = vmatprep.subr.mxu0 0.0
        %1980 = vmatpush1.msra.mxu0 0.0
        %1981 = vmatprep.subr.mxu0 0.0
        %1982 = vmatpush1.msra.mxu0 0.0
        %1983 = vmatprep.subr.mxu0 0.0
        %1984 = vmatpush1.msra.mxu0 0.0
        %1985 = vmatprep.subr.mxu0 0.0
        %1986 = vmatpush1.msra.mxu0 0.0
        %1987 = vmatprep.subr.mxu0 0.0
        %1988 = vmatpush1.msra.mxu0 0.0
        %1989 = vmatprep.subr.mxu0 0.0
        %1990 = vmatpush1.msra.mxu0 0.0
        %1991 = vmatprep.subr.mxu0 0.0
        %1992 = vmatpush1.msra.mxu0 0.0
        %1993 = vmatprep.subr.mxu0 0.0
        %1994 = vmatpush1.msra.mxu0 0.0
        %1995 = vmatprep.subr.mxu0 0.0
        %1996 = vmatpush1.msra.mxu0 0.0
        %1997 = vmatprep.subr.mxu0 0.0
        %1998 = vmatpush1.msra.mxu0 0.0
        %1999 = vmatprep.subr.mxu0 0.0
        %2000 = vmatpush1.msra.mxu0 0.0
        %2001 = vmatprep.subr.mxu0 0.0
        %2002 = vmatpush1.msra.mxu0 0.0
        %2003 = vmatprep.subr.mxu0 0.0
        %2004 = vmatpush1.msra.mxu0 0.0
        %2005 = vmatprep.subr.mxu0 0.0
        %2006 = vmatpush1.msra.mxu0 0.0
        %2007 = vmatprep.subr.mxu0 0.0
        %2008 = vmatpush1.msra.mxu0 0.0
        %2009 = vmatprep.subr.mxu0 0.0
        %2010 = vmatpush1.msra.mxu0 0.0
        %2011 = vmatprep.subr.mxu0 0.0
        %2012 = vmatpush1.msra.mxu0 0.0
        %2013 = vmatprep.subr.mxu0 0.0
        %2014 = vmatpush1.msra.mxu0 0.0
        %2015 = vmatprep.subr.mxu0 0.0
        %2016 = vmatpush1.msra.mxu0 0.0
        %2017 = vmatprep.mubr.f32.mxu0 0.0
        %2018 = vmatmul.mubr.f32.gmra.mrb[0].mxu0 %v979
        %v2019 = vpop.f32.mrb[0].mxu0
        %v2020 = vadd.f32 %v971, %v2019
        %v2021 = vpop.f32.mrb[0].mxu0
        %v2022 = vadd.f32 %v971, %v2021
        %2023 = vmatprep.mubr.f32.mxu0 0.0
        %2024 = vmatmul.mubr.f32.gmra.mrb[0].mxu0 %v982
        %v2025 = vpop.f32.mrb[0].mxu0
        %v2026 = vadd.f32 %v976, %v2025
        %v2027 = vpop.f32.mrb[0].mxu0
        %v2028 = vadd.f32 %v976, %v2027
        %2029 = vdwg.mxu0
        %2030 = vmatprep.subr.mxu0 %v1948
        %2031 = vmatpush1.msra.mxu0 %v1947
        %2032 = vmatprep.subr.mxu0 %v1952
        %2033 = vmatpush1.msra.mxu0 %v1951
        %2034 = vmatprep.subr.mxu0 0.0
        %2035 = vmatpush1.msra.mxu0 0.0
        %2036 = vmatprep.subr.mxu0 0.0
        %2037 = vmatpush1.msra.mxu0 0.0
        %2038 = vmatprep.subr.mxu0 0.0
        %2039 = vmatpush1.msra.mxu0 0.0
        %2040 = vmatprep.subr.mxu0 0.0
        %2041 = vmatpush1.msra.mxu0 0.0
        %2042 = vmatprep.subr.mxu0 0.0
        %2043 = vmatpush1.msra.mxu0 0.0
        %2044 = vmatprep.subr.mxu0 0.0
        %2045 = vmatpush1.msra.mxu0 0.0
        %2046 = vmatprep.subr.mxu0 0.0
        %2047 = vmatpush1.msra.mxu0 0.0
        %2048 = vmatprep.subr.mxu0 0.0
        %2049 = vmatpush1.msra.mxu0 0.0
        %2050 = vmatprep.subr.mxu0 0.0
        %2051 = vmatpush1.msra.mxu0 0.0
        %2052 = vmatprep.subr.mxu0 0.0
        %2053 = vmatpush1.msra.mxu0 0.0
        %2054 = vmatprep.subr.mxu0 0.0
        %2055 = vmatpush1.msra.mxu0 0.0
        %2056 = vmatprep.subr.mxu0 0.0
        %2057 = vmatpush1.msra.mxu0 0.0
        %2058 = vmatprep.subr.mxu0 0.0
        %2059 = vmatpush1.msra.mxu0 0.0
        %2060 = vmatprep.subr.mxu0 0.0
        %2061 = vmatpush1.msra.mxu0 0.0
        %2062 = vmatprep.subr.mxu0 0.0
        %2063 = vmatpush1.msra.mxu0 0.0
        %2064 = vmatprep.subr.mxu0 0.0
        %2065 = vmatpush1.msra.mxu0 0.0
        %2066 = vmatprep.subr.mxu0 0.0
        %2067 = vmatpush1.msra.mxu0 0.0
        %2068 = vmatprep.subr.mxu0 0.0
        %2069 = vmatpush1.msra.mxu0 0.0
        %2070 = vmatprep.subr.mxu0 0.0
        %2071 = vmatpush1.msra.mxu0 0.0
        %2072 = vmatprep.subr.mxu0 0.0
        %2073 = vmatpush1.msra.mxu0 0.0
        %2074 = vmatprep.subr.mxu0 0.0
        %2075 = vmatpush1.msra.mxu0 0.0
        %2076 = vmatprep.subr.mxu0 0.0
        %2077 = vmatpush1.msra.mxu0 0.0
        %2078 = vmatprep.subr.mxu0 0.0
        %2079 = vmatpush1.msra.mxu0 0.0
        %2080 = vmatprep.subr.mxu0 0.0
        %2081 = vmatpush1.msra.mxu0 0.0
        %2082 = vmatprep.subr.mxu0 0.0
        %2083 = vmatpush1.msra.mxu0 0.0
        %2084 = vmatprep.subr.mxu0 0.0
        %2085 = vmatpush1.msra.mxu0 0.0
        %2086 = vmatprep.subr.mxu0 0.0
        %2087 = vmatpush1.msra.mxu0 0.0
        %2088 = vmatprep.subr.mxu0 0.0
        %2089 = vmatpush1.msra.mxu0 0.0
        %2090 = vmatprep.subr.mxu0 0.0
        %2091 = vmatpush1.msra.mxu0 0.0
        %2092 = vmatprep.subr.mxu0 0.0
        %2093 = vmatpush1.msra.mxu0 0.0
        %2094 = vmatprep.mubr.f32.mxu0 0.0
        %2095 = vmatmul.mubr.f32.gmra.mrb[0].mxu0 %v979
        %v2096 = vpop.f32.mrb[0].mxu0
        %v2097 = vadd.f32 %v971, %v2096
        %v2098 = vpop.f32.mrb[0].mxu0
        %v2099 = vadd.f32 %v971, %v2098
        %2100 = vmatprep.mubr.f32.mxu0 0.0
        %2101 = vmatmul.mubr.f32.gmra.mrb[0].mxu0 %v982
        %v2102 = vpop.f32.mrb[0].mxu0
        %v2103 = vadd.f32 %v976, %v2102
        %v2104 = vpop.f32.mrb[0].mxu0
        %v2105 = vadd.f32 %v976, %v2104
        %2106 = vdwg.mxu0
        %v2107 = vtanh.pop %v2020
        %v2108 = vtanh.pop %v2022
        %v2109 = vtanh.pop %v2097
        %v2110 = vtanh.pop %v2099
        %v2111 = vtanh.pop %v2026
        %v2112 = vtanh.pop %v2028
        %v2113 = vtanh.pop %v2103
        %v2114 = vtanh.pop %v2105
        %2115 = vmatprep.subr.mxu0 %v2108
        %2116 = vmatpush1.msra.mxu0 %v2107
        %2117 = vmatprep.subr.mxu0 %v2112
        %2118 = vmatpush1.msra.mxu0 %v2111
        %2119 = vmatprep.subr.mxu0 0.0
        %2120 = vmatpush1.msra.mxu0 0.0
        %2121 = vmatprep.subr.mxu0 0.0
        %2122 = vmatpush1.msra.mxu0 0.0
        %2123 = vmatprep.subr.mxu0 0.0
        %2124 = vmatpush1.msra.mxu0 0.0
        %2125 = vmatprep.subr.mxu0 0.0
        %2126 = vmatpush1.msra.mxu0 0.0
        %2127 = vmatprep.subr.mxu0 0.0
        %2128 = vmatpush1.msra.mxu0 0.0
        %2129 = vmatprep.subr.mxu0 0.0
        %2130 = vmatpush1.msra.mxu0 0.0
        %2131 = vmatprep.subr.mxu0 0.0
        %2132 = vmatpush1.msra.mxu0 0.0
        %2133 = vmatprep.subr.mxu0 0.0
        %2134 = vmatpush1.msra.mxu0 0.0
        %2135 = vmatprep.subr.mxu0 0.0
        %2136 = vmatpush1.msra.mxu0 0.0
        %2137 = vmatprep.subr.mxu0 0.0
        %2138 = vmatpush1.msra.mxu0 0.0
        %2139 = vmatprep.subr.mxu0 0.0
        %2140 = vmatpush1.msra.mxu0 0.0
        %2141 = vmatprep.subr.mxu0 0.0
        %2142 = vmatpush1.msra.mxu0 0.0
        %2143 = vmatprep.subr.mxu0 0.0
        %2144 = vmatpush1.msra.mxu0 0.0
        %2145 = vmatprep.subr.mxu0 0.0
        %2146 = vmatpush1.msra.mxu0 0.0
        %2147 = vmatprep.subr.mxu0 0.0
        %2148 = vmatpush1.msra.mxu0 0.0
        %2149 = vmatprep.subr.mxu0 0.0
        %2150 = vmatpush1.msra.mxu0 0.0
        %2151 = vmatprep.subr.mxu0 0.0
        %2152 = vmatpush1.msra.mxu0 0.0
        %2153 = vmatprep.subr.mxu0 0.0
        %2154 = vmatpush1.msra.mxu0 0.0
        %2155 = vmatprep.subr.mxu0 0.0
        %2156 = vmatpush1.msra.mxu0 0.0
        %2157 = vmatprep.subr.mxu0 0.0
        %2158 = vmatpush1.msra.mxu0 0.0
        %2159 = vmatprep.subr.mxu0 0.0
        %2160 = vmatpush1.msra.mxu0 0.0
        %2161 = vmatprep.subr.mxu0 0.0
        %2162 = vmatpush1.msra.mxu0 0.0
        %2163 = vmatprep.subr.mxu0 0.0
        %2164 = vmatpush1.msra.mxu0 0.0
        %2165 = vmatprep.subr.mxu0 0.0
        %2166 = vmatpush1.msra.mxu0 0.0
        %2167 = vmatprep.subr.mxu0 0.0
        %2168 = vmatpush1.msra.mxu0 0.0
        %2169 = vmatprep.subr.mxu0 0.0
        %2170 = vmatpush1.msra.mxu0 0.0
        %2171 = vmatprep.subr.mxu0 0.0
        %2172 = vmatpush1.msra.mxu0 0.0
        %2173 = vmatprep.subr.mxu0 0.0
        %2174 = vmatpush1.msra.mxu0 0.0
        %2175 = vmatprep.subr.mxu0 0.0
        %2176 = vmatpush1.msra.mxu0 0.0
        %2177 = vmatprep.subr.mxu0 0.0
        %2178 = vmatpush1.msra.mxu0 0.0
        %2179 = vmatprep.mubr.f32.mxu0 0.0
        %2180 = vmatmul.mubr.f32.gmra.mrb[0].mxu0 %v1167
        %v2181 = vpop.f32.mrb[0].mxu0
        %v2182 = vadd.f32 %v1149, %v2181
        %v2183 = vpop.f32.mrb[0].mxu0
        %v2184 = vadd.f32 %v1149, %v2183
        %2185 = vmatprep.mubr.f32.mxu0 0.0
        %2186 = vmatmul.mubr.f32.gmra.mrb[0].mxu0 %v1170
        %v2187 = vpop.f32.mrb[0].mxu0
        %v2188 = vadd.f32 %v1154, %v2187
        %v2189 = vpop.f32.mrb[0].mxu0
        %v2190 = vadd.f32 %v1154, %v2189
        %2191 = vmatprep.mubr.f32.mxu0 0.0
        %2192 = vmatmul.mubr.f32.gmra.mrb[0].mxu0 %v1173
        %v2193 = vpop.f32.mrb[0].mxu0
        %v2194 = vadd.f32 %v1159, %v2193
        %v2195 = vpop.f32.mrb[0].mxu0
        %v2196 = vadd.f32 %v1159, %v2195
        %2197 = vmatprep.mubr.f32.mxu0 0.0
        %2198 = vmatmul.mubr.f32.gmra.mrb[0].mxu0 %v1176
        %v2199 = vpop.f32.mrb[0].mxu0
        %v2200 = vadd.f32 %v1164, %v2199
        %v2201 = vpop.f32.mrb[0].mxu0
        %v2202 = vadd.f32 %v1164, %v2201
        %2203 = vdwg.mxu0
        %2204 = vmatprep.subr.mxu0 %v2110
        %2205 = vmatpush1.msra.mxu0 %v2109
        %2206 = vmatprep.subr.mxu0 %v2114
        %2207 = vmatpush1.msra.mxu0 %v2113
        %2208 = vmatprep.subr.mxu0 0.0
        %2209 = vmatpush1.msra.mxu0 0.0
        %2210 = vmatprep.subr.mxu0 0.0
        %2211 = vmatpush1.msra.mxu0 0.0
        %2212 = vmatprep.subr.mxu0 0.0
        %2213 = vmatpush1.msra.mxu0 0.0
        %2214 = vmatprep.subr.mxu0 0.0
        %2215 = vmatpush1.msra.mxu0 0.0
        %2216 = vmatprep.subr.mxu0 0.0
        %2217 = vmatpush1.msra.mxu0 0.0
        %2218 = vmatprep.subr.mxu0 0.0
        %2219 = vmatpush1.msra.mxu0 0.0
        %2220 = vmatprep.subr.mxu0 0.0
        %2221 = vmatpush1.msra.mxu0 0.0
        %2222 = vmatprep.subr.mxu0 0.0
        %2223 = vmatpush1.msra.mxu0 0.0
        %2224 = vmatprep.subr.mxu0 0.0
        %2225 = vmatpush1.msra.mxu0 0.0
        %2226 = vmatprep.subr.mxu0 0.0
        %2227 = vmatpush1.msra.mxu0 0.0
        %2228 = vmatprep.subr.mxu0 0.0
        %2229 = vmatpush1.msra.mxu0 0.0
        %2230 = vmatprep.subr.mxu0 0.0
        %2231 = vmatpush1.msra.mxu0 0.0
        %2232 = vmatprep.subr.mxu0 0.0
        %2233 = vmatpush1.msra.mxu0 0.0
        %2234 = vmatprep.subr.mxu0 0.0
        %2235 = vmatpush1.msra.mxu0 0.0
        %2236 = vmatprep.subr.mxu0 0.0
        %2237 = vmatpush1.msra.mxu0 0.0
        %2238 = vmatprep.subr.mxu0 0.0
        %2239 = vmatpush1.msra.mxu0 0.0
        %2240 = vmatprep.subr.mxu0 0.0
        %2241 = vmatpush1.msra.mxu0 0.0
        %2242 = vmatprep.subr.mxu0 0.0
        %2243 = vmatpush1.msra.mxu0 0.0
        %2244 = vmatprep.subr.mxu0 0.0
        %2245 = vmatpush1.msra.mxu0 0.0
        %2246 = vmatprep.subr.mxu0 0.0
        %2247 = vmatpush1.msra.mxu0 0.0
        %2248 = vmatprep.subr.mxu0 0.0
        %2249 = vmatpush1.msra.mxu0 0.0
        %2250 = vmatprep.subr.mxu0 0.0
        %2251 = vmatpush1.msra.mxu0 0.0
        %2252 = vmatprep.subr.mxu0 0.0
        %2253 = vmatpush1.msra.mxu0 0.0
        %2254 = vmatprep.subr.mxu0 0.0
        %2255 = vmatpush1.msra.mxu0 0.0
        %2256 = vmatprep.subr.mxu0 0.0
        %2257 = vmatpush1.msra.mxu0 0.0
        %2258 = vmatprep.subr.mxu0 0.0
        %2259 = vmatpush1.msra.mxu0 0.0
        %2260 = vmatprep.subr.mxu0 0.0
        %2261 = vmatpush1.msra.mxu0 0.0
        %2262 = vmatprep.subr.mxu0 0.0
        %2263 = vmatpush1.msra.mxu0 0.0
        %2264 = vmatprep.subr.mxu0 0.0
        %2265 = vmatpush1.msra.mxu0 0.0
        %2266 = vmatprep.subr.mxu0 0.0
        %2267 = vmatpush1.msra.mxu0 0.0
        %2268 = vmatprep.mubr.f32.mxu0 0.0
        %2269 = vmatmul.mubr.f32.gmra.mrb[0].mxu0 %v1167
        %v2270 = vpop.f32.mrb[0].mxu0
        %v2271 = vadd.f32 %v1149, %v2270
        %v2272 = vpop.f32.mrb[0].mxu0
        %v2273 = vadd.f32 %v1149, %v2272
        %2274 = vmatprep.mubr.f32.mxu0 0.0
        %2275 = vmatmul.mubr.f32.gmra.mrb[0].mxu0 %v1170
        %v2276 = vpop.f32.mrb[0].mxu0
        %v2277 = vadd.f32 %v1154, %v2276
        %v2278 = vpop.f32.mrb[0].mxu0
        %v2279 = vadd.f32 %v1154, %v2278
        %2280 = vmatprep.mubr.f32.mxu0 0.0
        %2281 = vmatmul.mubr.f32.gmra.mrb[0].mxu0 %v1173
        %v2282 = vpop.f32.mrb[0].mxu0
        %v2283 = vadd.f32 %v1159, %v2282
        %v2284 = vpop.f32.mrb[0].mxu0
        %v2285 = vadd.f32 %v1159, %v2284
        %2286 = vmatprep.mubr.f32.mxu0 0.0
        %2287 = vmatmul.mubr.f32.gmra.mrb[0].mxu0 %v1176
        %v2288 = vpop.f32.mrb[0].mxu0
        %v2289 = vadd.f32 %v1164, %v2288
        %v2290 = vpop.f32.mrb[0].mxu0
        %v2291 = vadd.f32 %v1164, %v2290
        %2292 = vdwg.mxu0
        %s2293 = scalar_lea.vmem %s326, 32 [#allocation2]
        %2294 = vst [vmem:[%s2293] sm:$0xff] %v2182
        %2295 = vst [vmem:[%s2293 + $0x8] sm:$0xff] %v2184
        %2296 = vst [vmem:[%s2293 + $0x10] sm:$0xff] %v2271
        %2297 = vst [vmem:[%s2293 + $0x18] sm:$0xff] %v2273
        %2298 = vst [vmem:[%s2293 + $0x40] sm:$0xff] %v2188
        %2299 = vst [vmem:[%s2293 + $0x48] sm:$0xff] %v2190
        %2300 = vst [vmem:[%s2293 + $0x50] sm:$0xff] %v2277
        %2301 = vst [vmem:[%s2293 + $0x58] sm:$0xff] %v2279
        %2302 = vst [vmem:[%s2293 + $0x80] sm:$0xff] %v2194
        %2303 = vst [vmem:[%s2293 + $0x88] sm:$0xff] %v2196
        %2304 = vst [vmem:[%s2293 + $0x90] sm:$0xff] %v2283
        %2305 = vst [vmem:[%s2293 + $0x98] sm:$0xff] %v2285
        %2306 = vst [vmem:[%s2293 + $0xc0] sm:$0xff] %v2200
        %2307 = vst [vmem:[%s2293 + $0xc8] sm:$0xff] %v2202
        %2308 = vst [vmem:[%s2293 + $0xd0] sm:$0xff] %v2289
        %2309 = vst [vmem:[%s2293 + $0xd8] sm:$0xff] %v2291
        %s2310 = sand.u32 %s225, 1
        %s2311 = scalar_lea.sflag [#allocation3], %s2310
        %s2312 = sand.u32 %s225, 1
        %s2313 = smul.addr %s2312, 256
        %s2314 = scalar_lea.vmem [#allocation2], %s2313
        // Predicated region
        $region57: #{mlp_forward.1} parent=55 // pred_check
          %p2315 = pneg %p235
        $region58: #{mlp_forward.1} parent=55 // pred_check_branch
          %2317 = sbr.rel (%p2315) target = $region60
        $region59: #{mlp_forward.1} parent=55 // pred_region
          %s2318 = smul.u32 8, %s23
          %s2320 = ssub.s32 4096, 4096
          %2321 = vsyncadd %s2311, %s2320
          %s2322 = smul.addr %s2318, 128
          %s2323 = scalar_lea.hbm %s9, %s2322
          %s2324 = sshll.u32 %s2314, 4
          %s2325 = int_to_ptr.vmem [resolvable:$true] %s2324
          %2330 = dma.vmem_to_hbm [thread:$0]  %s2325, 4096, %s2323, %s2311, 1024, 4096, 64
        $region60: #{mlp_forward.1} parent=55 // pred_fallthru
          _
      $region56: #{mlp_forward.1} parent=5 // pred_fallthru
        _
      %p2331 = scmp.le.s32.totalorder 2, %s18
      // Predicated region
      $region61: #{mlp_forward.1} parent=5 // pred_check
        %p2332 = pneg %p2331
      $region62: #{mlp_forward.1} parent=5 // pred_check_branch
        %2334 = sbr.rel (%p2332) target = $region64
      $region63: #{mlp_forward.1} parent=5 // pred_region
        %s2335 = ssub.s32 %s18, 2
        // Predicated region
        $region65: #{mlp_forward.1} parent=63 // pred_check
          %p2336 = pneg %p241
        $region66: #{mlp_forward.1} parent=63 // pred_check_branch
          %2338 = sbr.rel (%p2336) target = $region68
        $region67: #{mlp_forward.1} parent=63 // pred_region
          %s2339 = sand.u32 %s226, 1
          %s2340 = scalar_lea.sflag [#allocation3], %s2339
          %s2341 = sand.u32 %s226, 1
          %s2342 = smul.addr %s2341, 256
          %s2343 = scalar_lea.vmem [#allocation2], %s2342
          %2344 = dma.done %s2340, 4096
        $region68: #{mlp_forward.1} parent=63 // pred_fallthru
          _
      $region64: #{mlp_forward.1} parent=5 // pred_fallthru
        _
    $region6: #{mlp_forward.1} parent=1 // loop_footer
      %s22 = sadd.s32 1, %s18
    $region7: #{mlp_forward.1} parent=1 // loop_footer_branch
      %17 = sbr.rel target = $region3
    $region8: #{mlp_forward.1} parent=1 // loop_exit
      _
    %2345 = vsyncpa [#allocation3], 1
    %s2346 = scalar_lea.sflag [#allocation3], 1
    %2347 = vsyncpa %s2346, 1

</llo_original>
